<compile_context>
chip_gen: v7x
topology: tpu7x:2x2x1
jax: 0.10.0
libtpu: 0.0.40
codegen_flags: <defaults>
</compile_context>

<pallas_src>
import functools
import math

import jax
import jax.numpy as jnp
from jax import lax
from jax.experimental import pallas as pl
from jax.experimental.pallas import tpu as pltpu

_LN_EPS = 1e-5


@functools.lru_cache(maxsize=1)
def _vmem_limit_bytes():
    """Generation-aware VMEM budget: ~75% of physical VMEM, capped at 100 MiB.
    v5e/v6e (128 MiB physical) -> 96 MiB, v7x (64 MiB physical) -> 48 MiB."""
    cap = 128 * 1024 * 1024
    try:
        cap = int(pltpu.get_tpu_info().vmem_capacity_bytes)
    except Exception:
        pass
    return min(int(cap * 3 // 4), 100 * 1024 * 1024)


def _layernorm_f32(h, g, b):
    mu = jnp.mean(h, axis=-1, keepdims=True)
    var = jnp.mean((h - mu) ** 2, axis=-1, keepdims=True)
    return (h - mu) * lax.rsqrt(var + _LN_EPS) * g + b


def _tile(n, target, align=128):
    """Largest divisor of n that is <= target and a multiple of `align`;
    falls back to the full dim when n is small or no aligned divisor exists."""
    if n <= target:
        return n
    t = (min(n, target) // align) * align
    while t >= align:
        if n % t == 0:
            return t
        t -= align
    return n


# ----------------------------------------------------------------------------
# Kernel 1: LayerNorm + fused QKV projection (packed (D, 3D) weight, bf16 MXU)
# ----------------------------------------------------------------------------
def _ln_qkv_kernel(x_ref, g_ref, b_ref, wqkv_ref, q_ref, k_ref, v_ref):
    D = x_ref.shape[-1]
    xn = _layernorm_f32(x_ref[0].astype(jnp.float32), g_ref[...], b_ref[...])
    xn_bf = xn.astype(jnp.bfloat16)
    # Single MXU matmul against the packed weight: one weight load, 3x wider N.
    qkv = jnp.dot(xn_bf, wqkv_ref[...], preferred_element_type=jnp.float32)  # (ts, 3D)
    scale = 1.0 / math.sqrt(float(D))                       # folded into q
    q_ref[0] = (qkv[:, :D] * scale).astype(jnp.bfloat16)
    k_ref[0] = qkv[:, D:2 * D].astype(jnp.bfloat16)
    v_ref[0] = qkv[:, 2 * D:].astype(jnp.bfloat16)


def _ln_qkv(x, p, ts):
    B, S, D = x.shape
    act_spec = pl.BlockSpec((1, ts, D), lambda b, s: (b, s, 0))
    # Constant-index blocks: DMA'd once and held resident.
    # TODO(synk): at realistic D (e.g. 4096) stream the contraction dim of the
    # packed (D, 3D) weight with a reduction grid axis (or single-buffer it)
    # so the weight does not hold 2x (D*3D) bf16 in VMEM on v7x.
    cspec = lambda shape: pl.BlockSpec(shape, lambda b, s: (0, 0))
    return pl.pallas_call(
        _ln_qkv_kernel,
        out_shape=tuple(jax.ShapeDtypeStruct((B, S, D), jnp.bfloat16)
                        for _ in range(3)),
        grid=(B, S // ts),
        in_specs=[act_spec,
                  cspec((1, D)), cspec((1, D)),
                  cspec((D, 3 * D))],
        out_specs=(act_spec, act_spec, act_spec),
        compiler_params=pltpu.CompilerParams(
            dimension_semantics=("parallel", "parallel"),
            vmem_limit_bytes=_vmem_limit_bytes()),
    )(x, p["ln1_g"], p["ln1_b"], p["wqkv"])


# ----------------------------------------------------------------------------
# Kernel 2: flash attention + fused output projection + residual + LN2
# ----------------------------------------------------------------------------
def _attn_proj_kernel(q_ref, k_ref, v_ref, bias_ref, x_ref, wo_ref, g2_ref,
                      b2_ref, h_ref, hn_ref, m_sc, l_sc, acc_sc):
    kv = pl.program_id(2)

    @pl.when(kv == 0)
    def _():
        m_sc[...] = jnp.full_like(m_sc, -jnp.inf)
        l_sc[...] = jnp.zeros_like(l_sc)
        acc_sc[...] = jnp.zeros_like(acc_sc)

    # Contract the shared last dim directly: no k.T / XLU transpose pass.
    s = lax.dot_general(q_ref[0], k_ref[0],
                        dimension_numbers=(((1,), (1,)), ((), ())),
                        preferred_element_type=jnp.float32)        # (tq, tk)
    s = s + bias_ref[0]                                            # (1, tk) additive mask

    m_prev = m_sc[...]
    m_new = jnp.maximum(m_prev, jnp.max(s, axis=-1, keepdims=True))
    alpha = jnp.exp(m_prev - m_new)
    # TODO(synk): on v6e/v7x this exp (and the GELU tanh in kernel 3) could be
    # computed in bf16 for ~2x EUP throughput; kept f32 so one kernel stays
    # optimal on v5e (no bf16 VPU/EUP).
    p = jnp.exp(s - m_new)
    l_sc[...] = alpha * l_sc[...] + jnp.sum(p, axis=-1, keepdims=True)
    acc_sc[...] = alpha * acc_sc[...] + jnp.dot(
        p.astype(jnp.bfloat16), v_ref[0], preferred_element_type=jnp.float32)
    m_sc[...] = m_new

    # TODO(synk): skip fully-padded KV tiles via scalar-prefetched per-row kv
    # lengths (PrefetchScalarGridSpec) when padding fractions are large.

    @pl.when(kv == pl.num_programs(2) - 1)
    def _():
        inv_l = pl.reciprocal(l_sc[...], approx=True)   # EUP, off the VPU path
        attn = (acc_sc[...] * inv_l).astype(jnp.bfloat16)
        # Fused epilogue: wo projection + residual + LN2.  Avoids one write +
        # one read of a (B, S, D) activation through HBM per layer and keeps
        # ln2/wo out of the F-streamed MLP grid.
        h = x_ref[0].astype(jnp.float32) + jnp.dot(
            attn, wo_ref[...], preferred_element_type=jnp.float32)
        h_ref[0] = h.astype(h_ref.dtype)
        hn_ref[0] = _layernorm_f32(h, g2_ref[...], b2_ref[...]).astype(hn_ref.dtype)


def _attn_proj_ln(q, k, v, bias, x, p, tq, tk):
    B, S, D = q.shape
    qo_spec = pl.BlockSpec((1, tq, D), lambda b, qi, ki: (b, qi, 0))
    kv_spec = pl.BlockSpec((1, tk, D), lambda b, qi, ki: (b, ki, 0))
    cspec = lambda shape: pl.BlockSpec(shape, lambda b, qi, ki: (0, 0))
    return pl.pallas_call(
        _attn_proj_kernel,
        out_shape=(jax.ShapeDtypeStruct((B, S, D), jnp.bfloat16),   # h (residual)
                   jax.ShapeDtypeStruct((B, S, D), jnp.bfloat16)),  # ln2(h)
        grid=(B, S // tq, S // tk),
        in_specs=[
            qo_spec, kv_spec, kv_spec,
            pl.BlockSpec((1, 1, tk), lambda b, qi, ki: (b, 0, ki)),  # mask bias
            qo_spec,                                                 # residual x
            cspec((D, D)),                                           # wo
            cspec((1, D)), cspec((1, D)),                            # ln2 g / b
        ],
        out_specs=(qo_spec, qo_spec),
        scratch_shapes=[pltpu.VMEM((tq, 1), jnp.float32),
                        pltpu.VMEM((tq, 1), jnp.float32),
                        pltpu.VMEM((tq, D), jnp.float32)],
        compiler_params=pltpu.CompilerParams(
            dimension_semantics=("parallel", "parallel", "arbitrary"),
            vmem_limit_bytes=_vmem_limit_bytes()),
    )(q, k, v, bias, x, p["wo"], p["ln2_g"], p["ln2_b"])


# ----------------------------------------------------------------------------
# Kernel 3: GELU MLP (hidden dim F streamed as reduction axis) + residual
# ----------------------------------------------------------------------------
def _mlp_kernel(h_ref, hn_ref, w1_ref, w2_ref, o_ref, mlp_sc):
    fi = pl.program_id(2)

    @pl.when(fi == 0)
    def _():
        mlp_sc[...] = jnp.zeros_like(mlp_sc)

    # One F-tile of the MLP: GELU is elementwise, so streaming F is exact.
    u = jnp.dot(hn_ref[0], w1_ref[...], preferred_element_type=jnp.float32)
    # TODO(synk): tanh-approx GELU; swap to exact erf (or SiLU/SwiGLU) to match
    # the real inner LLM's activation if required.
    g = 0.5 * u * (1.0 + jnp.tanh(0.7978845608028654 * (u + 0.044715 * u * u * u)))
    mlp_sc[...] += jnp.dot(g.astype(jnp.bfloat16), w2_ref[...],
                           preferred_element_type=jnp.float32)

    @pl.when(fi == pl.num_programs(2) - 1)
    def _():
        o_ref[0] = (h_ref[0].astype(jnp.float32) + mlp_sc[...]).astype(o_ref.dtype)


def _mlp(h, hn, p, ts, tf):
    B, S, D = h.shape
    F = p["w1"].shape[1]
    act_spec = pl.BlockSpec((1, ts, D), lambda b, s, f: (b, s, 0))
    return pl.pallas_call(
        _mlp_kernel,
        out_shape=jax.ShapeDtypeStruct((B, S, D), jnp.bfloat16),
        grid=(B, S // ts, F // tf),
        in_specs=[
            act_spec,                                        # h residual (bf16)
            act_spec,                                        # ln2(h) (bf16)
            pl.BlockSpec((D, tf), lambda b, s, f: (0, f)),   # w1 tile
            pl.BlockSpec((tf, D), lambda b, s, f: (f, 0)),   # w2 tile
        ],
        out_specs=act_spec,
        scratch_shapes=[pltpu.VMEM((ts, D), jnp.float32)],   # MLP accumulator
        compiler_params=pltpu.CompilerParams(
            dimension_semantics=("parallel", "parallel", "arbitrary"),
            vmem_limit_bytes=_vmem_limit_bytes()),
    )(h, hn, p["w1"], p["w2"])


def transformer_layer(x, bias, p):
    """x: (B, S, D) bf16 residual stream, bias: (B, 1, S) f32 additive mask bias."""
    B, S, D = x.shape
    F = p["w1"].shape[1]
    assert D % 128 == 0, "pad hidden dim to a multiple of 128 (lane width)"
    ts = _tile(S, 256)       # query / sequence tile
    tk = _tile(S, 512)       # kv tile (amortizes the per-step acc rescale)
    tf = _tile(F, 1024)      # MLP hidden-dim tile

    q, k, v = _ln_qkv(x, p, ts)
    h, hn = _attn_proj_ln(q, k, v, bias, x, p, ts, tk)
    return _mlp(h, hn, p, ts, tf)


# ----------------------------------------------------------------------------
# Deterministic synthetic parameters for the inner text model
# ----------------------------------------------------------------------------
def init_params(key, vocab, D, F, L):
    keys = jax.random.split(key, 1 + L)
    params = {"embed": 0.02 * jax.random.normal(keys[0], (vocab, D), jnp.float32)}
    sd = 1.0 / math.sqrt(float(D))
    sf = 1.0 / math.sqrt(float(F))
    layers = []
    for li in range(L):
        k = jax.random.split(keys[1 + li], 6)
        wq = sd * jax.random.normal(k[0], (D, D), jnp.float32)
        wk = sd * jax.random.normal(k[1], (D, D), jnp.float32)
        wv = sd * jax.random.normal(k[2], (D, D), jnp.float32)
        layers.append({
            # Weights stored in bf16: halves HBM->VMEM DMA bytes, feeds MXU at
            # bf16 peak (f32 accumulation inside the kernels).  Q/K/V packed
            # into one (D, 3D) weight for a single fused projection matmul.
            "wqkv": jnp.concatenate([wq, wk, wv], axis=1).astype(jnp.bfloat16),
            "wo": (sd * jax.random.normal(k[3], (D, D), jnp.float32)).astype(jnp.bfloat16),
            "w1": (sd * jax.random.normal(k[4], (D, F), jnp.float32)).astype(jnp.bfloat16),
            "w2": (sf * jax.random.normal(k[5], (F, D), jnp.float32)).astype(jnp.bfloat16),
            "ln1_g": jnp.ones((1, D), jnp.float32),
            "ln1_b": jnp.zeros((1, D), jnp.float32),
            "ln2_g": jnp.ones((1, D), jnp.float32),
            "ln2_b": jnp.zeros((1, D), jnp.float32),
        })
    params["layers"] = layers
    return params


# ----------------------------------------------------------------------------
# HunyuanMLLmModel wrapper (forward-pass semantics of the PyTorch module)
# ----------------------------------------------------------------------------
class HunyuanMLLmModel:
    def __init__(self, params, template_info, image_embed_interleave=2,
                 hidden_state_skip_layer=2):
        self.params = params
        self.template_info = template_info
        self.image_embed_interleave = image_embed_interleave
        self.hidden_state_skip_layer = hidden_state_skip_layer

    def _encode(self, input_ids, attention_mask):
        """Synthetic inner LLM: returns tuple of hidden states (emb + each layer)."""
        emb = jnp.take(self.params["embed"], input_ids, axis=0).astype(jnp.bfloat16)
        bias = ((1.0 - attention_mask.astype(jnp.float32)) * -1e9)[:, None, :]
        hidden_states = [emb]
        h = emb
        for layer in self.params["layers"]:
            h = transformer_layer(h, bias, layer)
            hidden_states.append(h)
        return tuple(hidden_states)

    def __call__(self, input_ids=None, attention_mask=None, pixel_values=None):
        crop_start = self.template_info.get("crop_start", None)
        hidden_states = self._encode(input_ids, attention_mask)
        prompt_embeds = hidden_states[-(self.hidden_state_skip_layer + 1)]

        if pixel_values is None:
            if crop_start is not None and crop_start > 0:
                prompt_embeds = prompt_embeds[:, crop_start:]
                if attention_mask is not None:
                    attention_mask = attention_mask[:, crop_start:]
        else:
            # TODO(synk): the inner MLLM's vision tower / image-token expansion is
            # not modeled; below only reproduces the post-hoc slicing arithmetic.
            image_emb_len = self.template_info.get("image_emb_len", 576)
            image_emb_start = self.template_info.get("image_emb_start", 5)
            image_emb_end = self.template_info.get("image_emb_end", 581)
            dr_id = self.template_info.get("double_return_token_id", 271)
            if crop_start is not None and crop_start > 0:
                B, S = input_ids.shape
                Se = prompt_embeds.shape[1]
                text_crop_start = crop_start - 1 + image_emb_len
                # last occurrence of double_return_token_id per row
                last = S - 1 - jnp.argmax(jnp.flip(input_ids == dr_id, axis=1), axis=1)
                assistant_crop_start = last - 1 + image_emb_len - 4
                am_assistant_crop_start = last - 4
                # drop the fixed-size 4-token assistant window (gap-gather)
                Lp = Se - text_crop_start - 4
                base = text_crop_start + jnp.arange(Lp)
                idx = jnp.where(base[None, :] < assistant_crop_start[:, None],
                                base[None, :], base[None, :] + 4)
                prompt_embed = jnp.take_along_axis(prompt_embeds, idx[:, :, None], axis=1)
                Lm = S - crop_start - 4
                mbase = crop_start + jnp.arange(Lm)
                midx = jnp.where(mbase[None, :] < am_assistant_crop_start[:, None],
                                 mbase[None, :], mbase[None, :] + 4)
                prompt_mask = jnp.take_along_axis(attention_mask, midx, axis=1)
                image_embed = prompt_embeds[:, image_emb_start:image_emb_end]
                image_mask = jnp.ones((B, image_embed.shape[1]), attention_mask.dtype)
                kk = self.image_embed_interleave
                if 0 < kk < 6:
                    image_embed = image_embed[:, ::kk, :]
                    image_mask = image_mask[:, ::kk]
                prompt_embeds = jnp.concatenate((image_embed, prompt_embed), axis=1)
                attention_mask = jnp.concatenate((image_mask, prompt_mask), axis=1)

        return (prompt_embeds,) * (self.hidden_state_skip_layer + 1), attention_mask


# ----------------------------------------------------------------------------
if __name__ == "__main__":
    key = jax.random.PRNGKey(0)
    # Small but hardware-tile-aligned shapes (D multiple of 128, S multiple of 128).
    B, S, D, F, L, vocab = 2, 256, 128, 512, 3, 512
    crop_start = 4

    params = init_params(key, vocab, D, F, L)
    template_info = {
        "crop_start": crop_start,
        "image_emb_len": 576,
        "image_emb_start": 5,
        "image_emb_end": 581,
        "double_return_token_id": 271,
    }
    model = HunyuanMLLmModel(params, template_info,
                             image_embed_interleave=2, hidden_state_skip_layer=2)

    k_ids = jax.random.fold_in(key, 1)
    input_ids = jax.random.randint(k_ids, (B, S), 0, vocab, dtype=jnp.int32)
    # row 0 fully valid, row 1 has 16 padding tokens at the end
    attention_mask = jnp.ones((B, S), jnp.int32)
    attention_mask = attention_mask.at[1, S - 16:].set(0)

    hidden_states, out_mask = model(input_ids=input_ids,
                                    attention_mask=attention_mask,
                                    pixel_values=None)

    jax.block_until_ready(hidden_states[0])
    jax.block_until_ready(out_mask)

    assert len(hidden_states) == model.hidden_state_skip_layer + 1
    assert hidden_states[0].shape == (B, S - crop_start, D)
    assert out_mask.shape == (B, S - crop_start)
    assert bool(jnp.all(jnp.isfinite(hidden_states[0].astype(jnp.float32))))

    print("KERNEL_OK")
</pallas_src>

<mosaic_0001>
module attributes {stable_mosaic.version = 11 : i64} {
  func.func @_ln_qkv_kernel(%arg0: i32, %arg1: i32, %arg2: memref<1x256x128xbf16, #tpu.memory_space<vmem>>, %arg3: memref<1x128xf32, #tpu.memory_space<vmem>>, %arg4: memref<1x128xf32, #tpu.memory_space<vmem>>, %arg5: memref<128x384xbf16, #tpu.memory_space<vmem>>, %arg6: memref<1x256x128xbf16, #tpu.memory_space<vmem>>, %arg7: memref<1x256x128xbf16, #tpu.memory_space<vmem>>, %arg8: memref<1x256x128xbf16, #tpu.memory_space<vmem>>) attributes {dimension_semantics = [#tpu.dimension_semantics<parallel>, #tpu.dimension_semantics<parallel>], iteration_bounds = array<i64: 2, 1>, scalar_prefetch = 0 : i64, scratch_operands = 0 : i64, tpu.core_type = #tpu.core_type<tc>, window_params = [{transform_indices = @transform_0, window_bounds = array<i64: 1, 256, 128>}, {pipeline_mode = #tpu.pipeline_mode<synchronous>, transform_indices = @transform_1, window_bounds = array<i64: 1, 128>}, {pipeline_mode = #tpu.pipeline_mode<synchronous>, transform_indices = @transform_2, window_bounds = array<i64: 1, 128>}, {pipeline_mode = #tpu.pipeline_mode<synchronous>, transform_indices = @transform_3, window_bounds = array<i64: 128, 384>}, {transform_indices = @transform_4, window_bounds = array<i64: 1, 256, 128>}, {transform_indices = @transform_5, window_bounds = array<i64: 1, 256, 128>}, {transform_indices = @transform_6, window_bounds = array<i64: 1, 256, 128>}]} {
    %c0 = arith.constant 0 : index
    %c0_0 = arith.constant 0 : index
    %c0_1 = arith.constant 0 : index
    %0 = vector.load %arg2[%c0, %c0_0, %c0_1] : memref<1x256x128xbf16, #tpu.memory_space<vmem>>, vector<1x256x128xbf16>
    %1 = vector.shape_cast %0 : vector<1x256x128xbf16> to vector<256x128xbf16>
    %2 = arith.extf %1 : vector<256x128xbf16> to vector<256x128xf32>
    %c0_2 = arith.constant 0 : index
    %c0_3 = arith.constant 0 : index
    %3 = vector.load %arg3[%c0_2, %c0_3] : memref<1x128xf32, #tpu.memory_space<vmem>>, vector<1x128xf32>
    %c0_4 = arith.constant 0 : index
    %c0_5 = arith.constant 0 : index
    %4 = vector.load %arg4[%c0_4, %c0_5] : memref<1x128xf32, #tpu.memory_space<vmem>>, vector<1x128xf32>
    %cst = arith.constant dense<0.000000e+00> : vector<256xf32>
    %5 = vector.multi_reduction <add>, %2, %cst [1] : vector<256x128xf32> to vector<256xf32>
    %6 = vector.shape_cast %5 : vector<256xf32> to vector<256x1xf32>
    %cst_6 = arith.constant 1.280000e+02 : f32
    %7 = vector.broadcast %cst_6 : f32 to vector<256x1xf32>
    %8 = arith.divf %6, %7 : vector<256x1xf32>
    %9 = vector.broadcast %8 : vector<256x1xf32> to vector<256x128xf32>
    %10 = arith.subf %2, %9 : vector<256x128xf32>
    %11 = arith.mulf %10, %10 : vector<256x128xf32>
    %cst_7 = arith.constant dense<0.000000e+00> : vector<256xf32>
    %12 = vector.multi_reduction <add>, %11, %cst_7 [1] : vector<256x128xf32> to vector<256xf32>
    %13 = vector.shape_cast %12 : vector<256xf32> to vector<256x1xf32>
    %cst_8 = arith.constant 1.280000e+02 : f32
    %14 = vector.broadcast %cst_8 : f32 to vector<256x1xf32>
    %15 = arith.divf %13, %14 : vector<256x1xf32>
    %16 = vector.broadcast %8 : vector<256x1xf32> to vector<256x128xf32>
    %17 = arith.subf %2, %16 : vector<256x128xf32>
    %cst_9 = arith.constant 9.99999974E-6 : f32
    %18 = vector.broadcast %cst_9 : f32 to vector<256x1xf32>
    %19 = arith.addf %15, %18 : vector<256x1xf32>
    %20 = math.rsqrt %19 : vector<256x1xf32>
    %21 = vector.broadcast %20 : vector<256x1xf32> to vector<256x128xf32>
    %22 = arith.mulf %17, %21 : vector<256x128xf32>
    %23 = vector.broadcast %3 : vector<1x128xf32> to vector<256x128xf32>
    %24 = arith.mulf %22, %23 : vector<256x128xf32>
    %25 = vector.broadcast %4 : vector<1x128xf32> to vector<256x128xf32>
    %26 = arith.addf %24, %25 : vector<256x128xf32>
    %27 = arith.truncf %26 : vector<256x128xf32> to vector<256x128xbf16>
    %c0_10 = arith.constant 0 : index
    %c0_11 = arith.constant 0 : index
    %28 = vector.load %arg5[%c0_10, %c0_11] : memref<128x384xbf16, #tpu.memory_space<vmem>>, vector<128x384xbf16>
    %cst_12 = arith.constant dense<0.000000e+00> : vector<256x384xf32>
    %29 = tpu.matmul %27, %28, %cst_12 {dimension_numbers = #tpu.dot_dimension_numbers<[1], [0], [0], [1], [0, 0, 1, 1], [], []>} : vector<256x128xbf16>, vector<128x384xbf16>, vector<256x384xf32> -> vector<256x384xf32>
    %30 = vector.extract_strided_slice %29 {offsets = [0, 0], sizes = [256, 128], strides = [1, 1]} : vector<256x384xf32> to vector<256x128xf32>
    %cst_13 = arith.constant 0.0883883461 : f32
    %31 = vector.broadcast %cst_13 : f32 to vector<256x128xf32>
    %32 = arith.mulf %30, %31 : vector<256x128xf32>
    %33 = arith.truncf %32 : vector<256x128xf32> to vector<256x128xbf16>
    %c0_14 = arith.constant 0 : index
    %c0_15 = arith.constant 0 : index
    %c0_16 = arith.constant 0 : index
    %34 = vector.load %arg6[%c0_14, %c0_15, %c0_16] : memref<1x256x128xbf16, #tpu.memory_space<vmem>>, vector<1x256x128xbf16>
    %35 = vector.shape_cast %34 : vector<1x256x128xbf16> to vector<256x128xbf16>
    %36 = vector.shape_cast %33 : vector<256x128xbf16> to vector<1x256x128xbf16>
    tpu.vector_store %arg6[%c0_14, %c0_15, %c0_16], %36 {strides = array<i32>} : memref<1x256x128xbf16, #tpu.memory_space<vmem>>, vector<1x256x128xbf16>,
    %37 = vector.extract_strided_slice %29 {offsets = [0, 128], sizes = [256, 128], strides = [1, 1]} : vector<256x384xf32> to vector<256x128xf32>
    %38 = arith.truncf %37 : vector<256x128xf32> to vector<256x128xbf16>
    %c0_17 = arith.constant 0 : index
    %c0_18 = arith.constant 0 : index
    %c0_19 = arith.constant 0 : index
    %39 = vector.load %arg7[%c0_17, %c0_18, %c0_19] : memref<1x256x128xbf16, #tpu.memory_space<vmem>>, vector<1x256x128xbf16>
    %40 = vector.shape_cast %39 : vector<1x256x128xbf16> to vector<256x128xbf16>
    %41 = vector.shape_cast %38 : vector<256x128xbf16> to vector<1x256x128xbf16>
    tpu.vector_store %arg7[%c0_17, %c0_18, %c0_19], %41 {strides = array<i32>} : memref<1x256x128xbf16, #tpu.memory_space<vmem>>, vector<1x256x128xbf16>,
    %42 = vector.extract_strided_slice %29 {offsets = [0, 256], sizes = [256, 128], strides = [1, 1]} : vector<256x384xf32> to vector<256x128xf32>
    %43 = arith.truncf %42 : vector<256x128xf32> to vector<256x128xbf16>
    %c0_20 = arith.constant 0 : index
    %c0_21 = arith.constant 0 : index
    %c0_22 = arith.constant 0 : index
    %44 = vector.load %arg8[%c0_20, %c0_21, %c0_22] : memref<1x256x128xbf16, #tpu.memory_space<vmem>>, vector<1x256x128xbf16>
    %45 = vector.shape_cast %44 : vector<1x256x128xbf16> to vector<256x128xbf16>
    %46 = vector.shape_cast %43 : vector<256x128xbf16> to vector<1x256x128xbf16>
    tpu.vector_store %arg8[%c0_20, %c0_21, %c0_22], %46 {strides = array<i32>} : memref<1x256x128xbf16, #tpu.memory_space<vmem>>, vector<1x256x128xbf16>,
    return
  }
  func.func @transform_0(%arg0: i32, %arg1: i32) -> (i32, i32, i32) {
    %c0_i32 = arith.constant 0 : i32
    %c0_i32_0 = arith.constant 0 : i32
    return %arg0, %arg1, %c0_i32 : i32, i32, i32
  }
  func.func @transform_1(%arg0: i32, %arg1: i32) -> (i32, i32) {
    %c0_i32 = arith.constant 0 : i32
    %c0_i32_0 = arith.constant 0 : i32
    %c0_i32_1 = arith.constant 0 : i32
    return %c0_i32, %c0_i32_0 : i32, i32
  }
  func.func @transform_2(%arg0: i32, %arg1: i32) -> (i32, i32) {
    %c0_i32 = arith.constant 0 : i32
    %c0_i32_0 = arith.constant 0 : i32
    %c0_i32_1 = arith.constant 0 : i32
    return %c0_i32, %c0_i32_0 : i32, i32
  }
  func.func @transform_3(%arg0: i32, %arg1: i32) -> (i32, i32) {
    %c0_i32 = arith.constant 0 : i32
    %c0_i32_0 = arith.constant 0 : i32
    %c0_i32_1 = arith.constant 0 : i32
    return %c0_i32, %c0_i32_0 : i32, i32
  }
  func.func @transform_4(%arg0: i32, %arg1: i32) -> (i32, i32, i32) {
    %c0_i32 = arith.constant 0 : i32
    %c0_i32_0 = arith.constant 0 : i32
    return %arg0, %arg1, %c0_i32 : i32, i32, i32
  }
  func.func @transform_5(%arg0: i32, %arg1: i32) -> (i32, i32, i32) {
    %c0_i32 = arith.constant 0 : i32
    %c0_i32_0 = arith.constant 0 : i32
    return %arg0, %arg1, %c0_i32 : i32, i32, i32
  }
  func.func @transform_6(%arg0: i32, %arg1: i32) -> (i32, i32, i32) {
    %c0_i32 = arith.constant 0 : i32
    %c0_i32_0 = arith.constant 0 : i32
    return %arg0, %arg1, %c0_i32 : i32, i32, i32
  }
}

</mosaic_0001>

<llo_original>
// kernel: tpu_custom_call.1
$region0: #{tpu_custom_call.1}
  #allocation0 [shape = 'u32[]', space=smem, size = 0x4, offset = 0x4, fixed_abs, tag = 'smem constant byte address 0x4 - core index']
  #allocation1 [shape = 'u32[144,128]{1,0:T(1,128)}', space=vmem, size = 0x12000, scoped, tag = 'internal scratch']
  %s0 = inlined_call_operand.hbm [shape: bf16[2,256,128], index: 0, kind: input, shape index: {}]
  %s1 = inlined_call_operand.hbm [shape: f32[1,128], index: 1, kind: input, shape index: {}]
  %s2 = inlined_call_operand.hbm [shape: f32[1,128], index: 2, kind: input, shape index: {}]
  %s3 = inlined_call_operand.hbm [shape: bf16[128,384], index: 3, kind: input, shape index: {}]
  %s4 = inlined_call_operand.hbm [shape: bf16[2,256,128], index: 4, kind: output, shape index: {0}]
  %s5 = inlined_call_operand.hbm [shape: bf16[2,256,128], index: 5, kind: output, shape index: {1}]
  %s6 = inlined_call_operand.hbm [shape: bf16[2,256,128], index: 6, kind: output, shape index: {2}]
  %7 = xla_tuple %s4, %s5, %s6
  %s8 = sld [smem:[#allocation0]]
  $region81: #{tpu_custom_call.1} parent=0
    _
  %s10 = ssub.s32 1, %s8
  %s11 = scalar_select 0, %s10, %s8
  $region1: #{tpu_custom_call.1} parent=0
    #allocation2 [shape = 'u8[131072]{0}', space=vmem, size = 0x20000, scoped, tag = 'input window, operand 0']
    #allocation3 [shape = 's32[2]{0}', space=sflag, size = 0x8, scoped, tag = 'scoped memory for tpu_custom_call.1']
    #allocation4 [shape = 's32[2]{0}', space=sflag, size = 0x8, scoped, tag = 'scoped memory for tpu_custom_call.1']
    #allocation5 [shape = 'u8[512]{0}', space=vmem, size = 0x400, scoped, tag = 'input window, operand 1, single buffered']
    #allocation6 [shape = 's32[1]{0}', space=sflag, size = 0x4, scoped, tag = 'scoped memory for tpu_custom_call.1']
    #allocation7 [shape = 'u8[512]{0}', space=vmem, size = 0x400, scoped, tag = 'input window, operand 2, single buffered']
    #allocation8 [shape = 'u8[98304]{0}', space=vmem, size = 0x18000, scoped, tag = 'input window, operand 3, single buffered']
    #allocation9 [shape = 's32[1]{0}', space=sflag, size = 0x4, scoped, tag = 'scoped memory for tpu_custom_call.1']
    #allocation10 [shape = 'u8[131072]{0}', space=vmem, size = 0x20000, scoped, tag = 'output window, operand 0']
    #allocation11 [shape = 'u8[131072]{0}', space=vmem, size = 0x20000, scoped, tag = 'output window, operand 1']
    #allocation12 [shape = 's32[2]{0}', space=sflag, size = 0x8, scoped, tag = 'scoped memory for tpu_custom_call.1']
    #allocation13 [shape = 'u8[131072]{0}', space=vmem, size = 0x20000, scoped, tag = 'output window, operand 2']
    %12 = vsyncpa [#allocation3], 0
    %s13 = scalar_lea.sflag [#allocation3], 1
    %14 = vsyncpa %s13, 0
    %15 = vsyncpa [#allocation6], 0
    %16 = vsyncpa [#allocation9], 0
    %17 = vsyncpa [#allocation4], 0
    %s18 = scalar_lea.sflag [#allocation4], 1
    %19 = vsyncpa %s18, 0
    %20 = vsyncpa [#allocation12], 0
    %s21 = scalar_lea.sflag [#allocation12], 1
    %22 = vsyncpa %s21, 0
    loop: start=0, step=1, limit=4
    $region2: #{tpu_custom_call.1} parent=1 // loop_pre_header
      _
    $region3: #{tpu_custom_call.1} parent=1 // loop_header
      %s24 = sphi 0, %s28
      %p25 = scmp.ge.s32.totalorder %s24, 4
      %s31 = sphi 0, %s43
      %s32 = sphi 0, %s39
      %s33 = sphi 0, %s31
      %s34 = sphi 0, %s32
      %s35 = sphi 0, %s33
      %s36 = sphi 0, %s34
      %s48 = sphi 0, %s50
      %s51 = sphi 0, %s48
      %s52 = sphi 0, %s51
      %s68 = sphi 0, %s52
      %s72 = sphi 0, %s72
      %s74 = sphi 0, %s72
      %s75 = sphi 0, %s74
      %s89 = sphi 0, %s75
      %s93 = sphi 0, %s93
      %s95 = sphi 0, %s93
      %s96 = sphi 0, %s95
      %s110 = sphi 0, %s96
      %s114 = sphi 0, %s114
      %s116 = sphi 0, %s114
      %s117 = sphi 0, %s116
      %s131 = sphi 0, %s117
      %s139 = sphi 0, %s141
      %s142 = sphi 0, %s139
      %s143 = sphi 0, %s142
      %s159 = sphi 0, %s143
      %s167 = sphi 0, %s169
      %s170 = sphi 0, %s167
      %s171 = sphi 0, %s170
      %s187 = sphi 0, %s171
      %s195 = sphi 0, %s197
      %s198 = sphi 0, %s195
      %s199 = sphi 0, %s198
      %s215 = sphi 0, %s199
    $region4: #{tpu_custom_call.1} parent=1 // loop_header_branch
      %27 = sbr.rel (%p25) target = $region8
    $region5: #{tpu_custom_call.1} parent=1 // loop_body
      %s29 = ssub.s32 %s24, 1
      %s30 = ssub.s32 %s24, 2
      %s37 = sadd.s32 1, %s32
      %p38 = scmp.ge.s32.totalorder %s37, 1
      %s39 = scalar_select %p38, 0, %s37
      %s40 = sadd.s32 1, %s31
      %s41 = scalar_select %p38, %s40, %s31
      %p42 = scmp.ge.s32.totalorder %s41, 2
      %s43 = scalar_select %p42, 0, %s41
      %s44 = ssub.s32 %s31, %s43
      %s45 = ssub.s32 %s32, %s39
      %s46 = sor.u32 %s44, %s45
      %p47 = scmp.eq.s32.totalorder %s46, 0
      %s49 = sadd.s32 %s48, 1
      %s50 = scalar_select %p47, %s48, %s49
      %p53 = pneg %p47
      %p54 = scmp.eq.s32.totalorder %s24, 1
      %p55 = por %p53, %p54
      %p56 = scmp.ne.s32.totalorder %s48, %s51
      %p57 = scmp.eq.s32.totalorder %s24, 0
      %p58 = por %p56, %p57
      %p59 = scmp.ne.s32.totalorder %s48, %s51
      %p60 = scmp.eq.s32.totalorder %s29, 1
      %p61 = por %p59, %p60
      %p62 = scmp.ne.s32.totalorder %s51, %s52
      %p63 = scmp.eq.s32.totalorder %s29, 0
      %p64 = por %p62, %p63
      %p65 = scmp.ne.s32.totalorder %s51, %s52
      %p66 = scmp.eq.s32.totalorder %s30, 1
      %p67 = por %p65, %p66
      %p69 = scmp.ne.s32.totalorder %s52, %s68
      %p70 = scmp.eq.s32.totalorder %s30, 0
      %p71 = por %p69, %p70
      %s73 = sadd.s32 %s72, 1
      %p76 = scmp.eq.s32.totalorder %s24, 1
      %p77 = scmp.ne.s32.totalorder %s72, %s74
      %p78 = scmp.eq.s32.totalorder %s24, 0
      %p79 = por %p77, %p78
      %p80 = scmp.ne.s32.totalorder %s72, %s74
      %p81 = scmp.eq.s32.totalorder %s29, 1
      %p82 = por %p80, %p81
      %p83 = scmp.ne.s32.totalorder %s74, %s75
      %p84 = scmp.eq.s32.totalorder %s29, 0
      %p85 = por %p83, %p84
      %p86 = scmp.ne.s32.totalorder %s74, %s75
      %p87 = scmp.eq.s32.totalorder %s30, 1
      %p88 = por %p86, %p87
      %p90 = scmp.ne.s32.totalorder %s75, %s89
      %p91 = scmp.eq.s32.totalorder %s30, 0
      %p92 = por %p90, %p91
      %s94 = sadd.s32 %s93, 1
      %p97 = scmp.eq.s32.totalorder %s24, 1
      %p98 = scmp.ne.s32.totalorder %s93, %s95
      %p99 = scmp.eq.s32.totalorder %s24, 0
      %p100 = por %p98, %p99
      %p101 = scmp.ne.s32.totalorder %s93, %s95
      %p102 = scmp.eq.s32.totalorder %s29, 1
      %p103 = por %p101, %p102
      %p104 = scmp.ne.s32.totalorder %s95, %s96
      %p105 = scmp.eq.s32.totalorder %s29, 0
      %p106 = por %p104, %p105
      %p107 = scmp.ne.s32.totalorder %s95, %s96
      %p108 = scmp.eq.s32.totalorder %s30, 1
      %p109 = por %p107, %p108
      %p111 = scmp.ne.s32.totalorder %s96, %s110
      %p112 = scmp.eq.s32.totalorder %s30, 0
      %p113 = por %p111, %p112
      %s115 = sadd.s32 %s114, 1
      %p118 = scmp.eq.s32.totalorder %s24, 1
      %p119 = scmp.ne.s32.totalorder %s114, %s116
      %p120 = scmp.eq.s32.totalorder %s24, 0
      %p121 = por %p119, %p120
      %p122 = scmp.ne.s32.totalorder %s114, %s116
      %p123 = scmp.eq.s32.totalorder %s29, 1
      %p124 = por %p122, %p123
      %p125 = scmp.ne.s32.totalorder %s116, %s117
      %p126 = scmp.eq.s32.totalorder %s29, 0
      %p127 = por %p125, %p126
      %p128 = scmp.ne.s32.totalorder %s116, %s117
      %p129 = scmp.eq.s32.totalorder %s30, 1
      %p130 = por %p128, %p129
      %p132 = scmp.ne.s32.totalorder %s117, %s131
      %p133 = scmp.eq.s32.totalorder %s30, 0
      %p134 = por %p132, %p133
      %s135 = ssub.s32 %s31, %s43
      %s136 = ssub.s32 %s32, %s39
      %s137 = sor.u32 %s135, %s136
      %p138 = scmp.eq.s32.totalorder %s137, 0
      %s140 = sadd.s32 %s139, 1
      %s141 = scalar_select %p138, %s139, %s140
      %p144 = pneg %p138
      %p145 = scmp.eq.s32.totalorder %s24, 1
      %p146 = por %p144, %p145
      %p147 = scmp.ne.s32.totalorder %s139, %s142
      %p148 = scmp.eq.s32.totalorder %s24, 0
      %p149 = por %p147, %p148
      %p150 = scmp.ne.s32.totalorder %s139, %s142
      %p151 = scmp.eq.s32.totalorder %s29, 1
      %p152 = por %p150, %p151
      %p153 = scmp.ne.s32.totalorder %s142, %s143
      %p154 = scmp.eq.s32.totalorder %s29, 0
      %p155 = por %p153, %p154
      %p156 = scmp.ne.s32.totalorder %s142, %s143
      %p157 = scmp.eq.s32.totalorder %s30, 1
      %p158 = por %p156, %p157
      %p160 = scmp.ne.s32.totalorder %s143, %s159
      %p161 = scmp.eq.s32.totalorder %s30, 0
      %p162 = por %p160, %p161
      %s163 = ssub.s32 %s31, %s43
      %s164 = ssub.s32 %s32, %s39
      %s165 = sor.u32 %s163, %s164
      %p166 = scmp.eq.s32.totalorder %s165, 0
      %s168 = sadd.s32 %s167, 1
      %s169 = scalar_select %p166, %s167, %s168
      %p172 = pneg %p166
      %p173 = scmp.eq.s32.totalorder %s24, 1
      %p174 = por %p172, %p173
      %p175 = scmp.ne.s32.totalorder %s167, %s170
      %p176 = scmp.eq.s32.totalorder %s24, 0
      %p177 = por %p175, %p176
      %p178 = scmp.ne.s32.totalorder %s167, %s170
      %p179 = scmp.eq.s32.totalorder %s29, 1
      %p180 = por %p178, %p179
      %p181 = scmp.ne.s32.totalorder %s170, %s171
      %p182 = scmp.eq.s32.totalorder %s29, 0
      %p183 = por %p181, %p182
      %p184 = scmp.ne.s32.totalorder %s170, %s171
      %p185 = scmp.eq.s32.totalorder %s30, 1
      %p186 = por %p184, %p185
      %p188 = scmp.ne.s32.totalorder %s171, %s187
      %p189 = scmp.eq.s32.totalorder %s30, 0
      %p190 = por %p188, %p189
      %s191 = ssub.s32 %s31, %s43
      %s192 = ssub.s32 %s32, %s39
      %s193 = sor.u32 %s191, %s192
      %p194 = scmp.eq.s32.totalorder %s193, 0
      %s196 = sadd.s32 %s195, 1
      %s197 = scalar_select %p194, %s195, %s196
      %p200 = pneg %p194
      %p201 = scmp.eq.s32.totalorder %s24, 1
      %p202 = por %p200, %p201
      %p203 = scmp.ne.s32.totalorder %s195, %s198
      %p204 = scmp.eq.s32.totalorder %s24, 0
      %p205 = por %p203, %p204
      %p206 = scmp.ne.s32.totalorder %s195, %s198
      %p207 = scmp.eq.s32.totalorder %s29, 1
      %p208 = por %p206, %p207
      %p209 = scmp.ne.s32.totalorder %s198, %s199
      %p210 = scmp.eq.s32.totalorder %s29, 0
      %p211 = por %p209, %p210
      %p212 = scmp.ne.s32.totalorder %s198, %s199
      %p213 = scmp.eq.s32.totalorder %s30, 1
      %p214 = por %p212, %p213
      %p216 = scmp.ne.s32.totalorder %s199, %s215
      %p217 = scmp.eq.s32.totalorder %s30, 0
      %p218 = por %p216, %p217
      %p219 = scmp.le.s32.totalorder 1, %s24
      %p220 = scmp.lt.s32.totalorder %s24, 3
      %p221 = pnand %p219, %p220
      %p222 = pneg %p221
      // Predicated region
      $region9: #{tpu_custom_call.1} parent=5 // pred_check
        _
      $region10: #{tpu_custom_call.1} parent=5 // pred_check_branch
        %224 = sbr.rel (%p221) target = $region12
      $region11: #{tpu_custom_call.1} parent=5 // pred_region
        %s225 = ssub.s32 %s24, 1
        // Predicated region
        $region13: #{tpu_custom_call.1} parent=11 // pred_check
          %p226 = pneg %p85
        $region14: #{tpu_custom_call.1} parent=11 // pred_check_branch
          %228 = sbr.rel (%p226) target = $region16
        $region15: #{tpu_custom_call.1} parent=11 // pred_region
          %s230 = ssub.s32 16, 16
          %231 = vsyncadd [#allocation6], %s230
          %s233 = sshll.u32 [#allocation5], 4
          %s234 = int_to_ptr.vmem [resolvable:$true] %s233
          %236 = dma.hbm_to_vmem [thread:$0]  %s1, 16, %s234, [#allocation6]
        $region16: #{tpu_custom_call.1} parent=11 // pred_fallthru
          _
        // Predicated region
        $region17: #{tpu_custom_call.1} parent=11 // pred_check
          %p237 = pneg %p106
        $region18: #{tpu_custom_call.1} parent=11 // pred_check_branch
          %239 = sbr.rel (%p237) target = $region20
        $region19: #{tpu_custom_call.1} parent=11 // pred_region
          %s241 = ssub.s32 16, 16
          %242 = vsyncadd [#allocation6], %s241
          %s244 = sshll.u32 [#allocation7], 4
          %s245 = int_to_ptr.vmem [resolvable:$true] %s244
          %247 = dma.hbm_to_vmem [thread:$0]  %s2, 16, %s245, [#allocation6]
        $region20: #{tpu_custom_call.1} parent=11 // pred_fallthru
          _
        // Predicated region
        $region21: #{tpu_custom_call.1} parent=11 // pred_check
          %p248 = pneg %p127
        $region22: #{tpu_custom_call.1} parent=11 // pred_check_branch
          %250 = sbr.rel (%p248) target = $region24
        $region23: #{tpu_custom_call.1} parent=11 // pred_region
          %s252 = ssub.s32 3072, 3072
          %253 = vsyncadd [#allocation9], %s252
          %s254 = sshll.u32 [#allocation8], 4
          %s255 = int_to_ptr.vmem [resolvable:$true] %s254
          %260 = dma.hbm_to_vmem [thread:$0]  %s3, 3072, %s255, [#allocation9], 192, 192, 12
        $region24: #{tpu_custom_call.1} parent=11 // pred_fallthru
          _
      $region12: #{tpu_custom_call.1} parent=5 // pred_fallthru
        _
      %p261 = scmp.lt.s32.totalorder %s24, 2
      // Predicated region
      $region25: #{tpu_custom_call.1} parent=5 // pred_check
        %p262 = pneg %p261
      $region26: #{tpu_custom_call.1} parent=5 // pred_check_branch
        %264 = sbr.rel (%p262) target = $region28
      $region27: #{tpu_custom_call.1} parent=5 // pred_region
        // Predicated region
        $region29: #{tpu_custom_call.1} parent=27 // pred_check
          %p265 = pneg %p58
        $region30: #{tpu_custom_call.1} parent=27 // pred_check_branch
          %267 = sbr.rel (%p265) target = $region32
        $region31: #{tpu_custom_call.1} parent=27 // pred_region
          %s268 = sand.u32 %s48, 1
          %s269 = scalar_lea.sflag [#allocation3], %s268
          %s270 = sand.u32 %s48, 1
          %s271 = smul.addr %s270, 128
          %s272 = scalar_lea.vmem [#allocation2], %s271
          %s273 = smul.u32 32, %s32
          %s275 = ssub.s32 2048, 2048
          %276 = vsyncadd %s269, %s275
          %s277 = smul.addr %s31, 32
          %s278 = sadd.s32 %s273, %s277
          %s279 = smul.addr %s278, 64
          %s280 = scalar_lea.hbm %s0, %s279
          %s281 = sshll.u32 %s272, 4
          %s282 = int_to_ptr.vmem [resolvable:$true] %s281
          %287 = dma.hbm_to_vmem [thread:$0]  %s280, 2048, %s282, %s269, 64, 64, 4
        $region32: #{tpu_custom_call.1} parent=27 // pred_fallthru
          _
      $region28: #{tpu_custom_call.1} parent=5 // pred_fallthru
        _
      %p288 = scmp.le.s32.totalorder 1, %s24
      %p289 = scmp.lt.s32.totalorder %s24, 3
      %p290 = pnand %p288, %p289
      %p291 = pneg %p290
      // Predicated region
      $region33: #{tpu_custom_call.1} parent=5 // pred_check
        _
      $region34: #{tpu_custom_call.1} parent=5 // pred_check_branch
        %293 = sbr.rel (%p290) target = $region36
      $region35: #{tpu_custom_call.1} parent=5 // pred_region
        %s294 = ssub.s32 %s24, 1
        %s295 = sand.u32 %s51, 1
        %s296 = scalar_lea.sflag [#allocation3], %s295
        %s297 = sand.u32 %s51, 1
        %s298 = smul.addr %s297, 128
        %s299 = scalar_lea.vmem [#allocation2], %s298
        // Predicated region
        $region37: #{tpu_custom_call.1} parent=35 // pred_check
          %p300 = pneg %p64
        $region38: #{tpu_custom_call.1} parent=35 // pred_check_branch
          %302 = sbr.rel (%p300) target = $region40
        $region39: #{tpu_custom_call.1} parent=35 // pred_region
          %303 = dma.done %s296, 2048
        $region40: #{tpu_custom_call.1} parent=35 // pred_fallthru
          _
        // Predicated region
        $region41: #{tpu_custom_call.1} parent=35 // pred_check
          %p304 = pneg %p85
        $region42: #{tpu_custom_call.1} parent=35 // pred_check_branch
          %306 = sbr.rel (%p304) target = $region44
        $region43: #{tpu_custom_call.1} parent=35 // pred_region
          %307 = dma.done [#allocation6], 16
        $region44: #{tpu_custom_call.1} parent=35 // pred_fallthru
          _
        // Predicated region
        $region45: #{tpu_custom_call.1} parent=35 // pred_check
          %p308 = pneg %p106
        $region46: #{tpu_custom_call.1} parent=35 // pred_check_branch
          %310 = sbr.rel (%p308) target = $region48
        $region47: #{tpu_custom_call.1} parent=35 // pred_region
          %311 = dma.done [#allocation6], 16
        $region48: #{tpu_custom_call.1} parent=35 // pred_fallthru
          _
        // Predicated region
        $region49: #{tpu_custom_call.1} parent=35 // pred_check
          %p312 = pneg %p127
        $region50: #{tpu_custom_call.1} parent=35 // pred_check_branch
          %314 = sbr.rel (%p312) target = $region52
        $region51: #{tpu_custom_call.1} parent=35 // pred_region
          %315 = dma.done [#allocation9], 3072
        $region52: #{tpu_custom_call.1} parent=35 // pred_fallthru
          _
        %s316 = sand.u32 %s51, 1
        %s317 = scalar_lea.sflag [#allocation3], %s316
        %s318 = sand.u32 %s51, 1
        %s319 = smul.addr %s318, 128
        %s320 = scalar_lea.vmem [#allocation2], %s319
        %p321 = pneg %p64
        %p322 = pneg %p61
        %p323 = pneg %p85
        %p324 = pneg %p82
        %p325 = pneg %p106
        %p326 = pneg %p103
        %p327 = pneg %p127
        %p328 = pneg %p124
        %p329 = pneg %p155
        %p330 = pneg %p152
        %s331 = sand.u32 %s142, 1
        %s332 = scalar_lea.sflag [#allocation4], %s331
        %s333 = sand.u32 %s142, 1
        %s334 = smul.addr %s333, 128
        %s335 = scalar_lea.vmem [#allocation10], %s334
        %p336 = pneg %p183
        %p337 = pneg %p180
        %s338 = sand.u32 %s29, 1
        %s339 = scalar_lea.sflag [#allocation12], %s338
        %s340 = sand.u32 %s170, 1
        %s341 = smul.addr %s340, 128
        %s342 = scalar_lea.vmem [#allocation11], %s341
        %p343 = pneg %p211
        %p344 = pneg %p208
        %s345 = sand.u32 %s29, 1
        %s346 = scalar_lea.sflag [#allocation12], %s345
        %s347 = sand.u32 %s198, 1
        %s348 = smul.addr %s347, 128
        %s349 = scalar_lea.vmem [#allocation13], %s348
        %s350 = smul.u32 32, %s34
        %s351 = smul.u32 32, %s34
        %s352 = smul.u32 32, %s34
        %s353 = smul.u32 32, %s34
        %v355 = vld [vmem:[%s299] sm:$0xf]
        %v356 = vld [vmem:[%s299 + $0x4] sm:$0xf]
        %v357 = vld [vmem:[%s299 + $0x8] sm:$0xf]
        %v358 = vld [vmem:[%s299 + $0xc] sm:$0xf]
        %v359 = vld [vmem:[%s299 + $0x10] sm:$0xf]
        %v360 = vld [vmem:[%s299 + $0x14] sm:$0xf]
        %v361 = vld [vmem:[%s299 + $0x18] sm:$0xf]
        %v362 = vld [vmem:[%s299 + $0x1c] sm:$0xf]
        %v363 = vld [vmem:[%s299 + $0x20] sm:$0xf]
        %v364 = vld [vmem:[%s299 + $0x24] sm:$0xf]
        %v365 = vld [vmem:[%s299 + $0x28] sm:$0xf]
        %v366 = vld [vmem:[%s299 + $0x2c] sm:$0xf]
        %v367 = vld [vmem:[%s299 + $0x30] sm:$0xf]
        %v368 = vld [vmem:[%s299 + $0x34] sm:$0xf]
        %v369 = vld [vmem:[%s299 + $0x38] sm:$0xf]
        %v370 = vld [vmem:[%s299 + $0x3c] sm:$0xf]
        %v371 = vld [vmem:[%s299 + $0x40] sm:$0xf]
        %v372 = vld [vmem:[%s299 + $0x44] sm:$0xf]
        %v373 = vld [vmem:[%s299 + $0x48] sm:$0xf]
        %v374 = vld [vmem:[%s299 + $0x4c] sm:$0xf]
        %v375 = vld [vmem:[%s299 + $0x50] sm:$0xf]
        %v376 = vld [vmem:[%s299 + $0x54] sm:$0xf]
        %v377 = vld [vmem:[%s299 + $0x58] sm:$0xf]
        %v378 = vld [vmem:[%s299 + $0x5c] sm:$0xf]
        %v379 = vld [vmem:[%s299 + $0x60] sm:$0xf]
        %v380 = vld [vmem:[%s299 + $0x64] sm:$0xf]
        %v381 = vld [vmem:[%s299 + $0x68] sm:$0xf]
        %v382 = vld [vmem:[%s299 + $0x6c] sm:$0xf]
        %v383 = vld [vmem:[%s299 + $0x70] sm:$0xf]
        %v384 = vld [vmem:[%s299 + $0x74] sm:$0xf]
        %v385 = vld [vmem:[%s299 + $0x78] sm:$0xf]
        %v386 = vld [vmem:[%s299 + $0x7c] sm:$0xf]
        %v387 = vunpack.c.l.bf16 %v355
        %v388 = vunpack.c.l.bf16 %v356
        %v389 = vunpack.c.l.bf16 %v357
        %v390 = vunpack.c.l.bf16 %v358
        %v391 = vunpack.c.l.bf16 %v359
        %v392 = vunpack.c.l.bf16 %v360
        %v393 = vunpack.c.l.bf16 %v361
        %v394 = vunpack.c.l.bf16 %v362
        %v395 = vunpack.c.l.bf16 %v363
        %v396 = vunpack.c.l.bf16 %v364
        %v397 = vunpack.c.l.bf16 %v365
        %v398 = vunpack.c.l.bf16 %v366
        %v399 = vunpack.c.l.bf16 %v367
        %v400 = vunpack.c.l.bf16 %v368
        %v401 = vunpack.c.l.bf16 %v369
        %v402 = vunpack.c.l.bf16 %v370
        %v403 = vunpack.c.l.bf16 %v371
        %v404 = vunpack.c.l.bf16 %v372
        %v405 = vunpack.c.l.bf16 %v373
        %v406 = vunpack.c.l.bf16 %v374
        %v407 = vunpack.c.l.bf16 %v375
        %v408 = vunpack.c.l.bf16 %v376
        %v409 = vunpack.c.l.bf16 %v377
        %v410 = vunpack.c.l.bf16 %v378
        %v411 = vunpack.c.l.bf16 %v379
        %v412 = vunpack.c.l.bf16 %v380
        %v413 = vunpack.c.l.bf16 %v381
        %v414 = vunpack.c.l.bf16 %v382
        %v415 = vunpack.c.l.bf16 %v383
        %v416 = vunpack.c.l.bf16 %v384
        %v417 = vunpack.c.l.bf16 %v385
        %v418 = vunpack.c.l.bf16 %v386
        %v419 = vld [vmem:[#allocation5] sm:$0x1]
        %v420 = vld [vmem:[#allocation7] sm:$0x1]
        %421 = vadd.xlane.f32.xlu0 %v387
        %v422 = vpop.xlane.xlu0 %421
        %423 = vadd.xlane.f32.xlu0 %v388
        %v424 = vpop.xlane.xlu0 %423
        %425 = vadd.xlane.f32.xlu0 %v389
        %v426 = vpop.xlane.xlu0 %425
        %427 = vadd.xlane.f32.xlu0 %v390
        %v428 = vpop.xlane.xlu0 %427
        %429 = vadd.xlane.f32.xlu0 %v391
        %v430 = vpop.xlane.xlu0 %429
        %431 = vadd.xlane.f32.xlu0 %v392
        %v432 = vpop.xlane.xlu0 %431
        %433 = vadd.xlane.f32.xlu0 %v393
        %v434 = vpop.xlane.xlu0 %433
        %435 = vadd.xlane.f32.xlu0 %v394
        %v436 = vpop.xlane.xlu0 %435
        %437 = vadd.xlane.f32.xlu0 %v395
        %v438 = vpop.xlane.xlu0 %437
        %439 = vadd.xlane.f32.xlu0 %v396
        %v440 = vpop.xlane.xlu0 %439
        %441 = vadd.xlane.f32.xlu0 %v397
        %v442 = vpop.xlane.xlu0 %441
        %443 = vadd.xlane.f32.xlu0 %v398
        %v444 = vpop.xlane.xlu0 %443
        %445 = vadd.xlane.f32.xlu0 %v399
        %v446 = vpop.xlane.xlu0 %445
        %447 = vadd.xlane.f32.xlu0 %v400
        %v448 = vpop.xlane.xlu0 %447
        %449 = vadd.xlane.f32.xlu0 %v401
        %v450 = vpop.xlane.xlu0 %449
        %451 = vadd.xlane.f32.xlu0 %v402
        %v452 = vpop.xlane.xlu0 %451
        %453 = vadd.xlane.f32.xlu0 %v403
        %v454 = vpop.xlane.xlu0 %453
        %455 = vadd.xlane.f32.xlu0 %v404
        %v456 = vpop.xlane.xlu0 %455
        %457 = vadd.xlane.f32.xlu0 %v405
        %v458 = vpop.xlane.xlu0 %457
        %459 = vadd.xlane.f32.xlu0 %v406
        %v460 = vpop.xlane.xlu0 %459
        %461 = vadd.xlane.f32.xlu0 %v407
        %v462 = vpop.xlane.xlu0 %461
        %463 = vadd.xlane.f32.xlu0 %v408
        %v464 = vpop.xlane.xlu0 %463
        %465 = vadd.xlane.f32.xlu0 %v409
        %v466 = vpop.xlane.xlu0 %465
        %467 = vadd.xlane.f32.xlu0 %v410
        %v468 = vpop.xlane.xlu0 %467
        %469 = vadd.xlane.f32.xlu0 %v411
        %v470 = vpop.xlane.xlu0 %469
        %471 = vadd.xlane.f32.xlu0 %v412
        %v472 = vpop.xlane.xlu0 %471
        %473 = vadd.xlane.f32.xlu0 %v413
        %v474 = vpop.xlane.xlu0 %473
        %475 = vadd.xlane.f32.xlu0 %v414
        %v476 = vpop.xlane.xlu0 %475
        %477 = vadd.xlane.f32.xlu0 %v415
        %v478 = vpop.xlane.xlu0 %477
        %479 = vadd.xlane.f32.xlu0 %v416
        %v480 = vpop.xlane.xlu0 %479
        %481 = vadd.xlane.f32.xlu0 %v417
        %v482 = vpop.xlane.xlu0 %481
        %483 = vadd.xlane.f32.xlu0 %v418
        %v484 = vpop.xlane.xlu0 %483
        %v485 = vrcp.pop 128.0
        %v486 = vmul.f32 %v422, %v485
        %v487 = vmul.f32 %v424, %v485
        %v488 = vmul.f32 %v426, %v485
        %v489 = vmul.f32 %v428, %v485
        %v490 = vmul.f32 %v430, %v485
        %v491 = vmul.f32 %v432, %v485
        %v492 = vmul.f32 %v434, %v485
        %v493 = vmul.f32 %v436, %v485
        %v494 = vmul.f32 %v438, %v485
        %v495 = vmul.f32 %v440, %v485
        %v496 = vmul.f32 %v442, %v485
        %v497 = vmul.f32 %v444, %v485
        %v498 = vmul.f32 %v446, %v485
        %v499 = vmul.f32 %v448, %v485
        %v500 = vmul.f32 %v450, %v485
        %v501 = vmul.f32 %v452, %v485
        %v502 = vmul.f32 %v454, %v485
        %v503 = vmul.f32 %v456, %v485
        %v504 = vmul.f32 %v458, %v485
        %v505 = vmul.f32 %v460, %v485
        %v506 = vmul.f32 %v462, %v485
        %v507 = vmul.f32 %v464, %v485
        %v508 = vmul.f32 %v466, %v485
        %v509 = vmul.f32 %v468, %v485
        %v510 = vmul.f32 %v470, %v485
        %v511 = vmul.f32 %v472, %v485
        %v512 = vmul.f32 %v474, %v485
        %v513 = vmul.f32 %v476, %v485
        %v514 = vmul.f32 %v478, %v485
        %v515 = vmul.f32 %v480, %v485
        %v516 = vmul.f32 %v482, %v485
        %v517 = vmul.f32 %v484, %v485
        %v518 = vsub.f32 %v387, %v486
        %v519 = vsub.f32 %v388, %v487
        %v520 = vsub.f32 %v389, %v488
        %v521 = vsub.f32 %v390, %v489
        %v522 = vsub.f32 %v391, %v490
        %v523 = vsub.f32 %v392, %v491
        %v524 = vsub.f32 %v393, %v492
        %v525 = vsub.f32 %v394, %v493
        %v526 = vsub.f32 %v395, %v494
        %v527 = vsub.f32 %v396, %v495
        %v528 = vsub.f32 %v397, %v496
        %v529 = vsub.f32 %v398, %v497
        %v530 = vsub.f32 %v399, %v498
        %v531 = vsub.f32 %v400, %v499
        %v532 = vsub.f32 %v401, %v500
        %v533 = vsub.f32 %v402, %v501
        %v534 = vsub.f32 %v403, %v502
        %v535 = vsub.f32 %v404, %v503
        %v536 = vsub.f32 %v405, %v504
        %v537 = vsub.f32 %v406, %v505
        %v538 = vsub.f32 %v407, %v506
        %v539 = vsub.f32 %v408, %v507
        %v540 = vsub.f32 %v409, %v508
        %v541 = vsub.f32 %v410, %v509
        %v542 = vsub.f32 %v411, %v510
        %v543 = vsub.f32 %v412, %v511
        %v544 = vsub.f32 %v413, %v512
        %v545 = vsub.f32 %v414, %v513
        %v546 = vsub.f32 %v415, %v514
        %v547 = vsub.f32 %v416, %v515
        %v548 = vsub.f32 %v417, %v516
        %v549 = vsub.f32 %v418, %v517
        %v550 = vmul.f32 %v518, %v518
        %v551 = vmul.f32 %v519, %v519
        %v552 = vmul.f32 %v520, %v520
        %v553 = vmul.f32 %v521, %v521
        %v554 = vmul.f32 %v522, %v522
        %v555 = vmul.f32 %v523, %v523
        %v556 = vmul.f32 %v524, %v524
        %v557 = vmul.f32 %v525, %v525
        %v558 = vmul.f32 %v526, %v526
        %v559 = vmul.f32 %v527, %v527
        %v560 = vmul.f32 %v528, %v528
        %v561 = vmul.f32 %v529, %v529
        %v562 = vmul.f32 %v530, %v530
        %v563 = vmul.f32 %v531, %v531
        %v564 = vmul.f32 %v532, %v532
        %v565 = vmul.f32 %v533, %v533
        %v566 = vmul.f32 %v534, %v534
        %v567 = vmul.f32 %v535, %v535
        %v568 = vmul.f32 %v536, %v536
        %v569 = vmul.f32 %v537, %v537
        %v570 = vmul.f32 %v538, %v538
        %v571 = vmul.f32 %v539, %v539
        %v572 = vmul.f32 %v540, %v540
        %v573 = vmul.f32 %v541, %v541
        %v574 = vmul.f32 %v542, %v542
        %v575 = vmul.f32 %v543, %v543
        %v576 = vmul.f32 %v544, %v544
        %v577 = vmul.f32 %v545, %v545
        %v578 = vmul.f32 %v546, %v546
        %v579 = vmul.f32 %v547, %v547
        %v580 = vmul.f32 %v548, %v548
        %v581 = vmul.f32 %v549, %v549
        %582 = vadd.xlane.f32.xlu0 %v550
        %v583 = vpop.xlane.xlu0 %582
        %584 = vadd.xlane.f32.xlu0 %v551
        %v585 = vpop.xlane.xlu0 %584
        %586 = vadd.xlane.f32.xlu0 %v552
        %v587 = vpop.xlane.xlu0 %586
        %588 = vadd.xlane.f32.xlu0 %v553
        %v589 = vpop.xlane.xlu0 %588
        %590 = vadd.xlane.f32.xlu0 %v554
        %v591 = vpop.xlane.xlu0 %590
        %592 = vadd.xlane.f32.xlu0 %v555
        %v593 = vpop.xlane.xlu0 %592
        %594 = vadd.xlane.f32.xlu0 %v556
        %v595 = vpop.xlane.xlu0 %594
        %596 = vadd.xlane.f32.xlu0 %v557
        %v597 = vpop.xlane.xlu0 %596
        %598 = vadd.xlane.f32.xlu0 %v558
        %v599 = vpop.xlane.xlu0 %598
        %600 = vadd.xlane.f32.xlu0 %v559
        %v601 = vpop.xlane.xlu0 %600
        %602 = vadd.xlane.f32.xlu0 %v560
        %v603 = vpop.xlane.xlu0 %602
        %604 = vadd.xlane.f32.xlu0 %v561
        %v605 = vpop.xlane.xlu0 %604
        %606 = vadd.xlane.f32.xlu0 %v562
        %v607 = vpop.xlane.xlu0 %606
        %608 = vadd.xlane.f32.xlu0 %v563
        %v609 = vpop.xlane.xlu0 %608
        %610 = vadd.xlane.f32.xlu0 %v564
        %v611 = vpop.xlane.xlu0 %610
        %612 = vadd.xlane.f32.xlu0 %v565
        %v613 = vpop.xlane.xlu0 %612
        %614 = vadd.xlane.f32.xlu0 %v566
        %v615 = vpop.xlane.xlu0 %614
        %616 = vadd.xlane.f32.xlu0 %v567
        %v617 = vpop.xlane.xlu0 %616
        %618 = vadd.xlane.f32.xlu0 %v568
        %v619 = vpop.xlane.xlu0 %618
        %620 = vadd.xlane.f32.xlu0 %v569
        %v621 = vpop.xlane.xlu0 %620
        %622 = vadd.xlane.f32.xlu0 %v570
        %v623 = vpop.xlane.xlu0 %622
        %624 = vadd.xlane.f32.xlu0 %v571
        %v625 = vpop.xlane.xlu0 %624
        %626 = vadd.xlane.f32.xlu0 %v572
        %v627 = vpop.xlane.xlu0 %626
        %628 = vadd.xlane.f32.xlu0 %v573
        %v629 = vpop.xlane.xlu0 %628
        %630 = vadd.xlane.f32.xlu0 %v574
        %v631 = vpop.xlane.xlu0 %630
        %632 = vadd.xlane.f32.xlu0 %v575
        %v633 = vpop.xlane.xlu0 %632
        %634 = vadd.xlane.f32.xlu0 %v576
        %v635 = vpop.xlane.xlu0 %634
        %636 = vadd.xlane.f32.xlu0 %v577
        %v637 = vpop.xlane.xlu0 %636
        %638 = vadd.xlane.f32.xlu0 %v578
        %v639 = vpop.xlane.xlu0 %638
        %640 = vadd.xlane.f32.xlu0 %v579
        %v641 = vpop.xlane.xlu0 %640
        %642 = vadd.xlane.f32.xlu0 %v580
        %v643 = vpop.xlane.xlu0 %642
        %644 = vadd.xlane.f32.xlu0 %v581
        %v645 = vpop.xlane.xlu0 %644
        %v646 = vmul.f32 %v583, %v485
        %v647 = vmul.f32 %v585, %v485
        %v648 = vmul.f32 %v587, %v485
        %v649 = vmul.f32 %v589, %v485
        %v650 = vmul.f32 %v591, %v485
        %v651 = vmul.f32 %v593, %v485
        %v652 = vmul.f32 %v595, %v485
        %v653 = vmul.f32 %v597, %v485
        %v654 = vmul.f32 %v599, %v485
        %v655 = vmul.f32 %v601, %v485
        %v656 = vmul.f32 %v603, %v485
        %v657 = vmul.f32 %v605, %v485
        %v658 = vmul.f32 %v607, %v485
        %v659 = vmul.f32 %v609, %v485
        %v660 = vmul.f32 %v611, %v485
        %v661 = vmul.f32 %v613, %v485
        %v662 = vmul.f32 %v615, %v485
        %v663 = vmul.f32 %v617, %v485
        %v664 = vmul.f32 %v619, %v485
        %v665 = vmul.f32 %v621, %v485
        %v666 = vmul.f32 %v623, %v485
        %v667 = vmul.f32 %v625, %v485
        %v668 = vmul.f32 %v627, %v485
        %v669 = vmul.f32 %v629, %v485
        %v670 = vmul.f32 %v631, %v485
        %v671 = vmul.f32 %v633, %v485
        %v672 = vmul.f32 %v635, %v485
        %v673 = vmul.f32 %v637, %v485
        %v674 = vmul.f32 %v639, %v485
        %v675 = vmul.f32 %v641, %v485
        %v676 = vmul.f32 %v643, %v485
        %v677 = vmul.f32 %v645, %v485
        %v678 = vadd.f32 %v646, 1e-05
        %v679 = vadd.f32 %v647, 1e-05
        %v680 = vadd.f32 %v648, 1e-05
        %v681 = vadd.f32 %v649, 1e-05
        %v682 = vadd.f32 %v650, 1e-05
        %v683 = vadd.f32 %v651, 1e-05
        %v684 = vadd.f32 %v652, 1e-05
        %v685 = vadd.f32 %v653, 1e-05
        %v686 = vadd.f32 %v654, 1e-05
        %v687 = vadd.f32 %v655, 1e-05
        %v688 = vadd.f32 %v656, 1e-05
        %v689 = vadd.f32 %v657, 1e-05
        %v690 = vadd.f32 %v658, 1e-05
        %v691 = vadd.f32 %v659, 1e-05
        %v692 = vadd.f32 %v660, 1e-05
        %v693 = vadd.f32 %v661, 1e-05
        %v694 = vadd.f32 %v662, 1e-05
        %v695 = vadd.f32 %v663, 1e-05
        %v696 = vadd.f32 %v664, 1e-05
        %v697 = vadd.f32 %v665, 1e-05
        %v698 = vadd.f32 %v666, 1e-05
        %v699 = vadd.f32 %v667, 1e-05
        %v700 = vadd.f32 %v668, 1e-05
        %v701 = vadd.f32 %v669, 1e-05
        %v702 = vadd.f32 %v670, 1e-05
        %v703 = vadd.f32 %v671, 1e-05
        %v704 = vadd.f32 %v672, 1e-05
        %v705 = vadd.f32 %v673, 1e-05
        %v706 = vadd.f32 %v674, 1e-05
        %v707 = vadd.f32 %v675, 1e-05
        %v708 = vadd.f32 %v676, 1e-05
        %v709 = vadd.f32 %v677, 1e-05
        %v710 = vrsqrt.pop %v678
        %v711 = vrsqrt.pop %v679
        %v712 = vrsqrt.pop %v680
        %v713 = vrsqrt.pop %v681
        %v714 = vrsqrt.pop %v682
        %v715 = vrsqrt.pop %v683
        %v716 = vrsqrt.pop %v684
        %v717 = vrsqrt.pop %v685
        %v718 = vrsqrt.pop %v686
        %v719 = vrsqrt.pop %v687
        %v720 = vrsqrt.pop %v688
        %v721 = vrsqrt.pop %v689
        %v722 = vrsqrt.pop %v690
        %v723 = vrsqrt.pop %v691
        %v724 = vrsqrt.pop %v692
        %v725 = vrsqrt.pop %v693
        %v726 = vrsqrt.pop %v694
        %v727 = vrsqrt.pop %v695
        %v728 = vrsqrt.pop %v696
        %v729 = vrsqrt.pop %v697
        %v730 = vrsqrt.pop %v698
        %v731 = vrsqrt.pop %v699
        %v732 = vrsqrt.pop %v700
        %v733 = vrsqrt.pop %v701
        %v734 = vrsqrt.pop %v702
        %v735 = vrsqrt.pop %v703
        %v736 = vrsqrt.pop %v704
        %v737 = vrsqrt.pop %v705
        %v738 = vrsqrt.pop %v706
        %v739 = vrsqrt.pop %v707
        %v740 = vrsqrt.pop %v708
        %v741 = vrsqrt.pop %v709
        %v742 = vmul.f32 %v518, %v710
        %v743 = vmul.f32 %v519, %v711
        %v744 = vmul.f32 %v520, %v712
        %v745 = vmul.f32 %v521, %v713
        %v746 = vmul.f32 %v522, %v714
        %v747 = vmul.f32 %v523, %v715
        %v748 = vmul.f32 %v524, %v716
        %v749 = vmul.f32 %v525, %v717
        %v750 = vmul.f32 %v526, %v718
        %v751 = vmul.f32 %v527, %v719
        %v752 = vmul.f32 %v528, %v720
        %v753 = vmul.f32 %v529, %v721
        %v754 = vmul.f32 %v530, %v722
        %v755 = vmul.f32 %v531, %v723
        %v756 = vmul.f32 %v532, %v724
        %v757 = vmul.f32 %v533, %v725
        %v758 = vmul.f32 %v534, %v726
        %v759 = vmul.f32 %v535, %v727
        %v760 = vmul.f32 %v536, %v728
        %v761 = vmul.f32 %v537, %v729
        %v762 = vmul.f32 %v538, %v730
        %v763 = vmul.f32 %v539, %v731
        %v764 = vmul.f32 %v540, %v732
        %v765 = vmul.f32 %v541, %v733
        %v766 = vmul.f32 %v542, %v734
        %v767 = vmul.f32 %v543, %v735
        %v768 = vmul.f32 %v544, %v736
        %v769 = vmul.f32 %v545, %v737
        %v770 = vmul.f32 %v546, %v738
        %v771 = vmul.f32 %v547, %v739
        %v772 = vmul.f32 %v548, %v740
        %v773 = vmul.f32 %v549, %v741
        %v775 = vlaneseq
        %v776 = vshrl.u32 %v775, 7
        %v777 = vsub.s32 0, %v776
        %v778 = vrot.slane %v419, %v777
        %v780 = vmul.f32 %v742, %v778
        %v781 = vmul.f32 %v743, %v778
        %v782 = vmul.f32 %v744, %v778
        %v783 = vmul.f32 %v745, %v778
        %v784 = vmul.f32 %v746, %v778
        %v785 = vmul.f32 %v747, %v778
        %v786 = vmul.f32 %v748, %v778
        %v787 = vmul.f32 %v749, %v778
        %v788 = vmul.f32 %v750, %v778
        %v789 = vmul.f32 %v751, %v778
        %v790 = vmul.f32 %v752, %v778
        %v791 = vmul.f32 %v753, %v778
        %v792 = vmul.f32 %v754, %v778
        %v793 = vmul.f32 %v755, %v778
        %v794 = vmul.f32 %v756, %v778
        %v795 = vmul.f32 %v757, %v778
        %v796 = vmul.f32 %v758, %v778
        %v797 = vmul.f32 %v759, %v778
        %v798 = vmul.f32 %v760, %v778
        %v799 = vmul.f32 %v761, %v778
        %v800 = vmul.f32 %v762, %v778
        %v801 = vmul.f32 %v763, %v778
        %v802 = vmul.f32 %v764, %v778
        %v803 = vmul.f32 %v765, %v778
        %v804 = vmul.f32 %v766, %v778
        %v805 = vmul.f32 %v767, %v778
        %v806 = vmul.f32 %v768, %v778
        %v807 = vmul.f32 %v769, %v778
        %v808 = vmul.f32 %v770, %v778
        %v809 = vmul.f32 %v771, %v778
        %v810 = vmul.f32 %v772, %v778
        %v811 = vmul.f32 %v773, %v778
        %v813 = vlaneseq
        %v814 = vshrl.u32 %v813, 7
        %v815 = vsub.s32 0, %v814
        %v816 = vrot.slane %v420, %v815
        %v818 = vadd.f32 %v780, %v816
        %v819 = vadd.f32 %v781, %v816
        %v820 = vadd.f32 %v782, %v816
        %v821 = vadd.f32 %v783, %v816
        %v822 = vadd.f32 %v784, %v816
        %v823 = vadd.f32 %v785, %v816
        %v824 = vadd.f32 %v786, %v816
        %v825 = vadd.f32 %v787, %v816
        %v826 = vadd.f32 %v788, %v816
        %v827 = vadd.f32 %v789, %v816
        %v828 = vadd.f32 %v790, %v816
        %v829 = vadd.f32 %v791, %v816
        %v830 = vadd.f32 %v792, %v816
        %v831 = vadd.f32 %v793, %v816
        %v832 = vadd.f32 %v794, %v816
        %v833 = vadd.f32 %v795, %v816
        %v834 = vadd.f32 %v796, %v816
        %v835 = vadd.f32 %v797, %v816
        %v836 = vadd.f32 %v798, %v816
        %v837 = vadd.f32 %v799, %v816
        %v838 = vadd.f32 %v800, %v816
        %v839 = vadd.f32 %v801, %v816
        %v840 = vadd.f32 %v802, %v816
        %v841 = vadd.f32 %v803, %v816
        %v842 = vadd.f32 %v804, %v816
        %v843 = vadd.f32 %v805, %v816
        %v844 = vadd.f32 %v806, %v816
        %v845 = vadd.f32 %v807, %v816
        %v846 = vadd.f32 %v808, %v816
        %v847 = vadd.f32 %v809, %v816
        %v848 = vadd.f32 %v810, %v816
        %v849 = vadd.f32 %v811, %v816
        %v850 = vpack.c.bf16 %v819, %v818
        %v851 = vpack.c.bf16 %v821, %v820
        %v852 = vpack.c.bf16 %v823, %v822
        %v853 = vpack.c.bf16 %v825, %v824
        %v854 = vpack.c.bf16 %v827, %v826
        %v855 = vpack.c.bf16 %v829, %v828
        %v856 = vpack.c.bf16 %v831, %v830
        %v857 = vpack.c.bf16 %v833, %v832
        %v858 = vpack.c.bf16 %v835, %v834
        %v859 = vpack.c.bf16 %v837, %v836
        %v860 = vpack.c.bf16 %v839, %v838
        %v861 = vpack.c.bf16 %v841, %v840
        %v862 = vpack.c.bf16 %v843, %v842
        %v863 = vpack.c.bf16 %v845, %v844
        %v864 = vpack.c.bf16 %v847, %v846
        %v865 = vpack.c.bf16 %v849, %v848
        %v866 = vld [vmem:[#allocation8] sm:$0xff]
        %v867 = vld [vmem:[#allocation8 + $0x8] sm:$0xf]
        %v868 = vld [vmem:[#allocation8 + $0xc] sm:$0xff]
        %v869 = vld [vmem:[#allocation8 + $0x14] sm:$0xf]
        %v870 = vld [vmem:[#allocation8 + $0x18] sm:$0xff]
        %v871 = vld [vmem:[#allocation8 + $0x20] sm:$0xf]
        %v872 = vld [vmem:[#allocation8 + $0x24] sm:$0xff]
        %v873 = vld [vmem:[#allocation8 + $0x2c] sm:$0xf]
        %v874 = vld [vmem:[#allocation8 + $0x30] sm:$0xff]
        %v875 = vld [vmem:[#allocation8 + $0x38] sm:$0xf]
        %v876 = vld [vmem:[#allocation8 + $0x3c] sm:$0xff]
        %v877 = vld [vmem:[#allocation8 + $0x44] sm:$0xf]
        %v878 = vld [vmem:[#allocation8 + $0x48] sm:$0xff]
        %v879 = vld [vmem:[#allocation8 + $0x50] sm:$0xf]
        %v880 = vld [vmem:[#allocation8 + $0x54] sm:$0xff]
        %v881 = vld [vmem:[#allocation8 + $0x5c] sm:$0xf]
        %v882 = vld [vmem:[#allocation8 + $0x60] sm:$0xff]
        %v883 = vld [vmem:[#allocation8 + $0x68] sm:$0xf]
        %v884 = vld [vmem:[#allocation8 + $0x6c] sm:$0xff]
        %v885 = vld [vmem:[#allocation8 + $0x74] sm:$0xf]
        %v886 = vld [vmem:[#allocation8 + $0x78] sm:$0xff]
        %v887 = vld [vmem:[#allocation8 + $0x80] sm:$0xf]
        %v888 = vld [vmem:[#allocation8 + $0x84] sm:$0xff]
        %v889 = vld [vmem:[#allocation8 + $0x8c] sm:$0xf]
        %v890 = vld [vmem:[#allocation8 + $0x90] sm:$0xff]
        %v891 = vld [vmem:[#allocation8 + $0x98] sm:$0xf]
        %v892 = vld [vmem:[#allocation8 + $0x9c] sm:$0xff]
        %v893 = vld [vmem:[#allocation8 + $0xa4] sm:$0xf]
        %v894 = vld [vmem:[#allocation8 + $0xa8] sm:$0xff]
        %v895 = vld [vmem:[#allocation8 + $0xb0] sm:$0xf]
        %v896 = vld [vmem:[#allocation8 + $0xb4] sm:$0xff]
        %v897 = vld [vmem:[#allocation8 + $0xbc] sm:$0xf]
        %v930 = vunpack.c.l.b16 %v866
        %v931 = vunpack.c.h.b16 %v866
        %v932 = vunpack.c.l.b16 %v867
        %v933 = vunpack.c.l.b16 %v868
        %v934 = vunpack.c.h.b16 %v868
        %v935 = vunpack.c.l.b16 %v869
        %v936 = vunpack.c.l.b16 %v870
        %v937 = vunpack.c.h.b16 %v870
        %v938 = vunpack.c.l.b16 %v871
        %v939 = vunpack.c.l.b16 %v872
        %v940 = vunpack.c.h.b16 %v872
        %v941 = vunpack.c.l.b16 %v873
        %v942 = vunpack.c.l.b16 %v874
        %v943 = vunpack.c.h.b16 %v874
        %v944 = vunpack.c.l.b16 %v875
        %v945 = vunpack.c.l.b16 %v876
        %v946 = vunpack.c.h.b16 %v876
        %v947 = vunpack.c.l.b16 %v877
        %v948 = vunpack.c.l.b16 %v878
        %v949 = vunpack.c.h.b16 %v878
        %v950 = vunpack.c.l.b16 %v879
        %v951 = vunpack.c.l.b16 %v880
        %v952 = vunpack.c.h.b16 %v880
        %v953 = vunpack.c.l.b16 %v881
        %v954 = vunpack.c.l.b16 %v882
        %v955 = vunpack.c.h.b16 %v882
        %v956 = vunpack.c.l.b16 %v883
        %v957 = vunpack.c.l.b16 %v884
        %v958 = vunpack.c.h.b16 %v884
        %v959 = vunpack.c.l.b16 %v885
        %v960 = vunpack.c.l.b16 %v886
        %v961 = vunpack.c.h.b16 %v886
        %v962 = vunpack.c.l.b16 %v887
        %v963 = vunpack.c.l.b16 %v888
        %v964 = vunpack.c.h.b16 %v888
        %v965 = vunpack.c.l.b16 %v889
        %v966 = vunpack.c.l.b16 %v890
        %v967 = vunpack.c.h.b16 %v890
        %v968 = vunpack.c.l.b16 %v891
        %v969 = vunpack.c.l.b16 %v892
        %v970 = vunpack.c.h.b16 %v892
        %v971 = vunpack.c.l.b16 %v893
        %v972 = vunpack.c.l.b16 %v894
        %v973 = vunpack.c.h.b16 %v894
        %v974 = vunpack.c.l.b16 %v895
        %v975 = vunpack.c.l.b16 %v896
        %v976 = vunpack.c.h.b16 %v896
        %v977 = vunpack.c.l.b16 %v897
        %v978 = vpack.c.b16 %v933, %v930
        %v979 = vpack.c.b16 %v934, %v931
        %v980 = vpack.c.b16 %v935, %v932
        %v981 = vpack.c.b16 %v939, %v936
        %v982 = vpack.c.b16 %v940, %v937
        %v983 = vpack.c.b16 %v941, %v938
        %v984 = vpack.c.b16 %v945, %v942
        %v985 = vpack.c.b16 %v946, %v943
        %v986 = vpack.c.b16 %v947, %v944
        %v987 = vpack.c.b16 %v951, %v948
        %v988 = vpack.c.b16 %v952, %v949
        %v989 = vpack.c.b16 %v953, %v950
        %v990 = vpack.c.b16 %v957, %v954
        %v991 = vpack.c.b16 %v958, %v955
        %v992 = vpack.c.b16 %v959, %v956
        %v993 = vpack.c.b16 %v963, %v960
        %v994 = vpack.c.b16 %v964, %v961
        %v995 = vpack.c.b16 %v965, %v962
        %v996 = vpack.c.b16 %v969, %v966
        %v997 = vpack.c.b16 %v970, %v967
        %v998 = vpack.c.b16 %v971, %v968
        %v999 = vpack.c.b16 %v975, %v972
        %v1000 = vpack.c.b16 %v976, %v973
        %v1001 = vpack.c.b16 %v977, %v974
        %1026 = vmatprep.subr.bf16.mxu0 %v979
        %1027 = vmatpush1.bf16.msra.mxu0 %v978
        %1028 = vmatprep.subr.bf16.mxu0 %v982
        %1029 = vmatpush1.bf16.msra.mxu0 %v981
        %1030 = vmatprep.subr.bf16.mxu0 %v985
        %1031 = vmatpush1.bf16.msra.mxu0 %v984
        %1032 = vmatprep.subr.bf16.mxu0 %v988
        %1033 = vmatpush1.bf16.msra.mxu0 %v987
        %1034 = vmatprep.subr.bf16.mxu0 %v991
        %1035 = vmatpush1.bf16.msra.mxu0 %v990
        %1036 = vmatprep.subr.bf16.mxu0 %v994
        %1037 = vmatpush1.bf16.msra.mxu0 %v993
        %1038 = vmatprep.subr.bf16.mxu0 %v997
        %1039 = vmatpush1.bf16.msra.mxu0 %v996
        %1040 = vmatprep.subr.bf16.mxu0 %v1000
        %1041 = vmatpush1.bf16.msra.mxu0 %v999
        %1042 = vmatprep.subr.bf16.mxu0 0
        %1043 = vmatpush1.bf16.msra.mxu0 0
        %1044 = vmatprep.subr.bf16.mxu0 0
        %1045 = vmatpush1.bf16.msra.mxu0 0
        %1046 = vmatprep.subr.bf16.mxu0 0
        %1047 = vmatpush1.bf16.msra.mxu0 0
        %1048 = vmatprep.subr.bf16.mxu0 0
        %1049 = vmatpush1.bf16.msra.mxu0 0
        %1050 = vmatprep.subr.bf16.mxu0 0
        %1051 = vmatpush1.bf16.msra.mxu0 0
        %1052 = vmatprep.subr.bf16.mxu0 0
        %1053 = vmatpush1.bf16.msra.mxu0 0
        %1054 = vmatprep.subr.bf16.mxu0 0
        %1055 = vmatpush1.bf16.msra.mxu0 0
        %1056 = vmatprep.subr.bf16.mxu0 0
        %1057 = vmatpush1.bf16.msra.mxu0 0
        %1058 = vmatprep.mubr.bf16.mxu0 0
        %1059 = vmatmul.mubr.bf16.gmra.mrb[0].mxu0 %v850
        %v1060 = vpop.f32.mrb[0].mxu0
        %v1061 = vadd.f32 0.0, %v1060
        %v1062 = vpop.f32.mrb[0].mxu0
        %v1063 = vadd.f32 0.0, %v1062
        %v1064 = vpop.f32.mrb[0].mxu0
        %v1065 = vadd.f32 0.0, %v1064
        %v1066 = vpop.f32.mrb[0].mxu0
        %v1067 = vadd.f32 0.0, %v1066
        %1068 = vmatprep.mubr.bf16.mxu0 0
        %1069 = vmatmul.mubr.bf16.gmra.mrb[0].mxu0 %v851
        %v1070 = vpop.f32.mrb[0].mxu0
        %v1071 = vadd.f32 0.0, %v1070
        %v1072 = vpop.f32.mrb[0].mxu0
        %v1073 = vadd.f32 0.0, %v1072
        %v1074 = vpop.f32.mrb[0].mxu0
        %v1075 = vadd.f32 0.0, %v1074
        %v1076 = vpop.f32.mrb[0].mxu0
        %v1077 = vadd.f32 0.0, %v1076
        %1078 = vmatprep.mubr.bf16.mxu0 0
        %1079 = vmatmul.mubr.bf16.gmra.mrb[0].mxu0 %v852
        %v1080 = vpop.f32.mrb[0].mxu0
        %v1081 = vadd.f32 0.0, %v1080
        %v1082 = vpop.f32.mrb[0].mxu0
        %v1083 = vadd.f32 0.0, %v1082
        %v1084 = vpop.f32.mrb[0].mxu0
        %v1085 = vadd.f32 0.0, %v1084
        %v1086 = vpop.f32.mrb[0].mxu0
        %v1087 = vadd.f32 0.0, %v1086
        %1088 = vmatprep.mubr.bf16.mxu0 0
        %1089 = vmatmul.mubr.bf16.gmra.mrb[0].mxu0 %v853
        %v1090 = vpop.f32.mrb[0].mxu0
        %v1091 = vadd.f32 0.0, %v1090
        %v1092 = vpop.f32.mrb[0].mxu0
        %v1093 = vadd.f32 0.0, %v1092
        %v1094 = vpop.f32.mrb[0].mxu0
        %v1095 = vadd.f32 0.0, %v1094
        %v1096 = vpop.f32.mrb[0].mxu0
        %v1097 = vadd.f32 0.0, %v1096
        %1098 = vmatprep.mubr.bf16.mxu0 0
        %1099 = vmatmul.mubr.bf16.gmra.mrb[0].mxu0 %v854
        %v1100 = vpop.f32.mrb[0].mxu0
        %v1101 = vadd.f32 0.0, %v1100
        %v1102 = vpop.f32.mrb[0].mxu0
        %v1103 = vadd.f32 0.0, %v1102
        %v1104 = vpop.f32.mrb[0].mxu0
        %v1105 = vadd.f32 0.0, %v1104
        %v1106 = vpop.f32.mrb[0].mxu0
        %v1107 = vadd.f32 0.0, %v1106
        %1108 = vmatprep.mubr.bf16.mxu0 0
        %1109 = vmatmul.mubr.bf16.gmra.mrb[0].mxu0 %v855
        %v1110 = vpop.f32.mrb[0].mxu0
        %v1111 = vadd.f32 0.0, %v1110
        %v1112 = vpop.f32.mrb[0].mxu0
        %v1113 = vadd.f32 0.0, %v1112
        %v1114 = vpop.f32.mrb[0].mxu0
        %v1115 = vadd.f32 0.0, %v1114
        %v1116 = vpop.f32.mrb[0].mxu0
        %v1117 = vadd.f32 0.0, %v1116
        %1118 = vmatprep.mubr.bf16.mxu0 0
        %1119 = vmatmul.mubr.bf16.gmra.mrb[0].mxu0 %v856
        %v1120 = vpop.f32.mrb[0].mxu0
        %v1121 = vadd.f32 0.0, %v1120
        %v1122 = vpop.f32.mrb[0].mxu0
        %v1123 = vadd.f32 0.0, %v1122
        %v1124 = vpop.f32.mrb[0].mxu0
        %v1125 = vadd.f32 0.0, %v1124
        %v1126 = vpop.f32.mrb[0].mxu0
        %v1127 = vadd.f32 0.0, %v1126
        %1128 = vmatprep.mubr.bf16.mxu0 0
        %1129 = vmatmul.mubr.bf16.gmra.mrb[0].mxu0 %v857
        %v1130 = vpop.f32.mrb[0].mxu0
        %v1131 = vadd.f32 0.0, %v1130
        %v1132 = vpop.f32.mrb[0].mxu0
        %v1133 = vadd.f32 0.0, %v1132
        %v1134 = vpop.f32.mrb[0].mxu0
        %v1135 = vadd.f32 0.0, %v1134
        %v1136 = vpop.f32.mrb[0].mxu0
        %v1137 = vadd.f32 0.0, %v1136
        %1138 = vmatprep.mubr.bf16.mxu0 0
        %1139 = vmatmul.mubr.bf16.gmra.mrb[0].mxu0 %v858
        %v1140 = vpop.f32.mrb[0].mxu0
        %v1141 = vadd.f32 0.0, %v1140
        %v1142 = vpop.f32.mrb[0].mxu0
        %v1143 = vadd.f32 0.0, %v1142
        %v1144 = vpop.f32.mrb[0].mxu0
        %v1145 = vadd.f32 0.0, %v1144
        %v1146 = vpop.f32.mrb[0].mxu0
        %v1147 = vadd.f32 0.0, %v1146
        %1148 = vmatprep.mubr.bf16.mxu0 0
        %1149 = vmatmul.mubr.bf16.gmra.mrb[0].mxu0 %v859
        %v1150 = vpop.f32.mrb[0].mxu0
        %v1151 = vadd.f32 0.0, %v1150
        %v1152 = vpop.f32.mrb[0].mxu0
        %v1153 = vadd.f32 0.0, %v1152
        %v1154 = vpop.f32.mrb[0].mxu0
        %v1155 = vadd.f32 0.0, %v1154
        %v1156 = vpop.f32.mrb[0].mxu0
        %v1157 = vadd.f32 0.0, %v1156
        %1158 = vmatprep.mubr.bf16.mxu0 0
        %1159 = vmatmul.mubr.bf16.gmra.mrb[0].mxu0 %v860
        %v1160 = vpop.f32.mrb[0].mxu0
        %v1161 = vadd.f32 0.0, %v1160
        %v1162 = vpop.f32.mrb[0].mxu0
        %v1163 = vadd.f32 0.0, %v1162
        %v1164 = vpop.f32.mrb[0].mxu0
        %v1165 = vadd.f32 0.0, %v1164
        %v1166 = vpop.f32.mrb[0].mxu0
        %v1167 = vadd.f32 0.0, %v1166
        %1168 = vmatprep.mubr.bf16.mxu0 0
        %1169 = vmatmul.mubr.bf16.gmra.mrb[0].mxu0 %v861
        %v1170 = vpop.f32.mrb[0].mxu0
        %v1171 = vadd.f32 0.0, %v1170
        %v1172 = vpop.f32.mrb[0].mxu0
        %v1173 = vadd.f32 0.0, %v1172
        %v1174 = vpop.f32.mrb[0].mxu0
        %v1175 = vadd.f32 0.0, %v1174
        %v1176 = vpop.f32.mrb[0].mxu0
        %v1177 = vadd.f32 0.0, %v1176
        %1178 = vmatprep.mubr.bf16.mxu0 0
        %1179 = vmatmul.mubr.bf16.gmra.mrb[0].mxu0 %v862
        %v1180 = vpop.f32.mrb[0].mxu0
        %v1181 = vadd.f32 0.0, %v1180
        %v1182 = vpop.f32.mrb[0].mxu0
        %v1183 = vadd.f32 0.0, %v1182
        %v1184 = vpop.f32.mrb[0].mxu0
        %v1185 = vadd.f32 0.0, %v1184
        %v1186 = vpop.f32.mrb[0].mxu0
        %v1187 = vadd.f32 0.0, %v1186
        %1188 = vmatprep.mubr.bf16.mxu0 0
        %1189 = vmatmul.mubr.bf16.gmra.mrb[0].mxu0 %v863
        %v1190 = vpop.f32.mrb[0].mxu0
        %v1191 = vadd.f32 0.0, %v1190
        %v1192 = vpop.f32.mrb[0].mxu0
        %v1193 = vadd.f32 0.0, %v1192
        %v1194 = vpop.f32.mrb[0].mxu0
        %v1195 = vadd.f32 0.0, %v1194
        %v1196 = vpop.f32.mrb[0].mxu0
        %v1197 = vadd.f32 0.0, %v1196
        %1198 = vmatprep.mubr.bf16.mxu0 0
        %1199 = vmatmul.mubr.bf16.gmra.mrb[0].mxu0 %v864
        %v1200 = vpop.f32.mrb[0].mxu0
        %v1201 = vadd.f32 0.0, %v1200
        %v1202 = vpop.f32.mrb[0].mxu0
        %v1203 = vadd.f32 0.0, %v1202
        %v1204 = vpop.f32.mrb[0].mxu0
        %v1205 = vadd.f32 0.0, %v1204
        %v1206 = vpop.f32.mrb[0].mxu0
        %v1207 = vadd.f32 0.0, %v1206
        %1208 = vmatprep.mubr.bf16.mxu0 0
        %1209 = vmatmul.mubr.bf16.gmra.mrb[0].mxu0 %v865
        %v1210 = vpop.f32.mrb[0].mxu0
        %v1211 = vadd.f32 0.0, %v1210
        %v1212 = vpop.f32.mrb[0].mxu0
        %v1213 = vadd.f32 0.0, %v1212
        %v1214 = vpop.f32.mrb[0].mxu0
        %v1215 = vadd.f32 0.0, %v1214
        %v1216 = vpop.f32.mrb[0].mxu0
        %v1217 = vadd.f32 0.0, %v1216
        %1218 = vdwg.mxu0
        %1219 = vmatprep.subr.bf16.mxu0 0
        %1220 = vmatpush1.bf16.msra.mxu0 %v980
        %1221 = vmatprep.subr.bf16.mxu0 0
        %1222 = vmatpush1.bf16.msra.mxu0 %v983
        %1223 = vmatprep.subr.bf16.mxu0 0
        %1224 = vmatpush1.bf16.msra.mxu0 %v986
        %1225 = vmatprep.subr.bf16.mxu0 0
        %1226 = vmatpush1.bf16.msra.mxu0 %v989
        %1227 = vmatprep.subr.bf16.mxu0 0
        %1228 = vmatpush1.bf16.msra.mxu0 %v992
        %1229 = vmatprep.subr.bf16.mxu0 0
        %1230 = vmatpush1.bf16.msra.mxu0 %v995
        %1231 = vmatprep.subr.bf16.mxu0 0
        %1232 = vmatpush1.bf16.msra.mxu0 %v998
        %1233 = vmatprep.subr.bf16.mxu0 0
        %1234 = vmatpush1.bf16.msra.mxu0 %v1001
        %1235 = vmatprep.subr.bf16.mxu0 0
        %1236 = vmatpush1.bf16.msra.mxu0 0
        %1237 = vmatprep.subr.bf16.mxu0 0
        %1238 = vmatpush1.bf16.msra.mxu0 0
        %1239 = vmatprep.subr.bf16.mxu0 0
        %1240 = vmatpush1.bf16.msra.mxu0 0
        %1241 = vmatprep.subr.bf16.mxu0 0
        %1242 = vmatpush1.bf16.msra.mxu0 0
        %1243 = vmatprep.subr.bf16.mxu0 0
        %1244 = vmatpush1.bf16.msra.mxu0 0
        %1245 = vmatprep.subr.bf16.mxu0 0
        %1246 = vmatpush1.bf16.msra.mxu0 0
        %1247 = vmatprep.subr.bf16.mxu0 0
        %1248 = vmatpush1.bf16.msra.mxu0 0
        %1249 = vmatprep.subr.bf16.mxu0 0
        %1250 = vmatpush1.bf16.msra.mxu0 0
        %1251 = vmatprep.mubr.bf16.mxu0 0
        %1252 = vmatmul.mubr.bf16.gmra.mrb[0].mxu0 %v850
        %v1253 = vpop.f32.mrb[0].mxu0
        %v1254 = vadd.f32 0.0, %v1253
        %v1255 = vpop.f32.mrb[0].mxu0
        %v1256 = vpop.f32.mrb[0].mxu0
        %v1257 = vadd.f32 0.0, %v1256
        %v1258 = vpop.f32.mrb[0].mxu0
        %1259 = vmatprep.mubr.bf16.mxu0 0
        %1260 = vmatmul.mubr.bf16.gmra.mrb[0].mxu0 %v851
        %v1261 = vpop.f32.mrb[0].mxu0
        %v1262 = vadd.f32 0.0, %v1261
        %v1263 = vpop.f32.mrb[0].mxu0
        %v1264 = vpop.f32.mrb[0].mxu0
        %v1265 = vadd.f32 0.0, %v1264
        %v1266 = vpop.f32.mrb[0].mxu0
        %1267 = vmatprep.mubr.bf16.mxu0 0
        %1268 = vmatmul.mubr.bf16.gmra.mrb[0].mxu0 %v852
        %v1269 = vpop.f32.mrb[0].mxu0
        %v1270 = vadd.f32 0.0, %v1269
        %v1271 = vpop.f32.mrb[0].mxu0
        %v1272 = vpop.f32.mrb[0].mxu0
        %v1273 = vadd.f32 0.0, %v1272
        %v1274 = vpop.f32.mrb[0].mxu0
        %1275 = vmatprep.mubr.bf16.mxu0 0
        %1276 = vmatmul.mubr.bf16.gmra.mrb[0].mxu0 %v853
        %v1277 = vpop.f32.mrb[0].mxu0
        %v1278 = vadd.f32 0.0, %v1277
        %v1279 = vpop.f32.mrb[0].mxu0
        %v1280 = vpop.f32.mrb[0].mxu0
        %v1281 = vadd.f32 0.0, %v1280
        %v1282 = vpop.f32.mrb[0].mxu0
        %1283 = vmatprep.mubr.bf16.mxu0 0
        %1284 = vmatmul.mubr.bf16.gmra.mrb[0].mxu0 %v854
        %v1285 = vpop.f32.mrb[0].mxu0
        %v1286 = vadd.f32 0.0, %v1285
        %v1287 = vpop.f32.mrb[0].mxu0
        %v1288 = vpop.f32.mrb[0].mxu0
        %v1289 = vadd.f32 0.0, %v1288
        %v1290 = vpop.f32.mrb[0].mxu0
        %1291 = vmatprep.mubr.bf16.mxu0 0
        %1292 = vmatmul.mubr.bf16.gmra.mrb[0].mxu0 %v855
        %v1293 = vpop.f32.mrb[0].mxu0
        %v1294 = vadd.f32 0.0, %v1293
        %v1295 = vpop.f32.mrb[0].mxu0
        %v1296 = vpop.f32.mrb[0].mxu0
        %v1297 = vadd.f32 0.0, %v1296
        %v1298 = vpop.f32.mrb[0].mxu0
        %1299 = vmatprep.mubr.bf16.mxu0 0
        %1300 = vmatmul.mubr.bf16.gmra.mrb[0].mxu0 %v856
        %v1301 = vpop.f32.mrb[0].mxu0
        %v1302 = vadd.f32 0.0, %v1301
        %v1303 = vpop.f32.mrb[0].mxu0
        %v1304 = vpop.f32.mrb[0].mxu0
        %v1305 = vadd.f32 0.0, %v1304
        %v1306 = vpop.f32.mrb[0].mxu0
        %1307 = vmatprep.mubr.bf16.mxu0 0
        %1308 = vmatmul.mubr.bf16.gmra.mrb[0].mxu0 %v857
        %v1309 = vpop.f32.mrb[0].mxu0
        %v1310 = vadd.f32 0.0, %v1309
        %v1311 = vpop.f32.mrb[0].mxu0
        %v1312 = vpop.f32.mrb[0].mxu0
        %v1313 = vadd.f32 0.0, %v1312
        %v1314 = vpop.f32.mrb[0].mxu0
        %1315 = vmatprep.mubr.bf16.mxu0 0
        %1316 = vmatmul.mubr.bf16.gmra.mrb[0].mxu0 %v858
        %v1317 = vpop.f32.mrb[0].mxu0
        %v1318 = vadd.f32 0.0, %v1317
        %v1319 = vpop.f32.mrb[0].mxu0
        %v1320 = vpop.f32.mrb[0].mxu0
        %v1321 = vadd.f32 0.0, %v1320
        %v1322 = vpop.f32.mrb[0].mxu0
        %1323 = vmatprep.mubr.bf16.mxu0 0
        %1324 = vmatmul.mubr.bf16.gmra.mrb[0].mxu0 %v859
        %v1325 = vpop.f32.mrb[0].mxu0
        %v1326 = vadd.f32 0.0, %v1325
        %v1327 = vpop.f32.mrb[0].mxu0
        %v1328 = vpop.f32.mrb[0].mxu0
        %v1329 = vadd.f32 0.0, %v1328
        %v1330 = vpop.f32.mrb[0].mxu0
        %1331 = vmatprep.mubr.bf16.mxu0 0
        %1332 = vmatmul.mubr.bf16.gmra.mrb[0].mxu0 %v860
        %v1333 = vpop.f32.mrb[0].mxu0
        %v1334 = vadd.f32 0.0, %v1333
        %v1335 = vpop.f32.mrb[0].mxu0
        %v1336 = vpop.f32.mrb[0].mxu0
        %v1337 = vadd.f32 0.0, %v1336
        %v1338 = vpop.f32.mrb[0].mxu0
        %1339 = vmatprep.mubr.bf16.mxu0 0
        %1340 = vmatmul.mubr.bf16.gmra.mrb[0].mxu0 %v861
        %v1341 = vpop.f32.mrb[0].mxu0
        %v1342 = vadd.f32 0.0, %v1341
        %v1343 = vpop.f32.mrb[0].mxu0
        %v1344 = vpop.f32.mrb[0].mxu0
        %v1345 = vadd.f32 0.0, %v1344
        %v1346 = vpop.f32.mrb[0].mxu0
        %1347 = vmatprep.mubr.bf16.mxu0 0
        %1348 = vmatmul.mubr.bf16.gmra.mrb[0].mxu0 %v862
        %v1349 = vpop.f32.mrb[0].mxu0
        %v1350 = vadd.f32 0.0, %v1349
        %v1351 = vpop.f32.mrb[0].mxu0
        %v1352 = vpop.f32.mrb[0].mxu0
        %v1353 = vadd.f32 0.0, %v1352
        %v1354 = vpop.f32.mrb[0].mxu0
        %1355 = vmatprep.mubr.bf16.mxu0 0
        %1356 = vmatmul.mubr.bf16.gmra.mrb[0].mxu0 %v863
        %v1357 = vpop.f32.mrb[0].mxu0
        %v1358 = vadd.f32 0.0, %v1357
        %v1359 = vpop.f32.mrb[0].mxu0
        %v1360 = vpop.f32.mrb[0].mxu0
        %v1361 = vadd.f32 0.0, %v1360
        %v1362 = vpop.f32.mrb[0].mxu0
        %1363 = vmatprep.mubr.bf16.mxu0 0
        %1364 = vmatmul.mubr.bf16.gmra.mrb[0].mxu0 %v864
        %v1365 = vpop.f32.mrb[0].mxu0
        %v1366 = vadd.f32 0.0, %v1365
        %v1367 = vpop.f32.mrb[0].mxu0
        %v1368 = vpop.f32.mrb[0].mxu0
        %v1369 = vadd.f32 0.0, %v1368
        %v1370 = vpop.f32.mrb[0].mxu0
        %1371 = vmatprep.mubr.bf16.mxu0 0
        %1372 = vmatmul.mubr.bf16.gmra.mrb[0].mxu0 %v865
        %v1373 = vpop.f32.mrb[0].mxu0
        %v1374 = vadd.f32 0.0, %v1373
        %v1375 = vpop.f32.mrb[0].mxu0
        %v1376 = vpop.f32.mrb[0].mxu0
        %v1377 = vadd.f32 0.0, %v1376
        %v1378 = vpop.f32.mrb[0].mxu0
        %1379 = vdwg.mxu0
        %v1380 = vmul.f32 %v1061, 0.088388346
        %v1381 = vmul.f32 %v1065, 0.088388346
        %v1382 = vmul.f32 %v1071, 0.088388346
        %v1383 = vmul.f32 %v1075, 0.088388346
        %v1384 = vmul.f32 %v1081, 0.088388346
        %v1385 = vmul.f32 %v1085, 0.088388346
        %v1386 = vmul.f32 %v1091, 0.088388346
        %v1387 = vmul.f32 %v1095, 0.088388346
        %v1388 = vmul.f32 %v1101, 0.088388346
        %v1389 = vmul.f32 %v1105, 0.088388346
        %v1390 = vmul.f32 %v1111, 0.088388346
        %v1391 = vmul.f32 %v1115, 0.088388346
        %v1392 = vmul.f32 %v1121, 0.088388346
        %v1393 = vmul.f32 %v1125, 0.088388346
        %v1394 = vmul.f32 %v1131, 0.088388346
        %v1395 = vmul.f32 %v1135, 0.088388346
        %v1396 = vmul.f32 %v1141, 0.088388346
        %v1397 = vmul.f32 %v1145, 0.088388346
        %v1398 = vmul.f32 %v1151, 0.088388346
        %v1399 = vmul.f32 %v1155, 0.088388346
        %v1400 = vmul.f32 %v1161, 0.088388346
        %v1401 = vmul.f32 %v1165, 0.088388346
        %v1402 = vmul.f32 %v1171, 0.088388346
        %v1403 = vmul.f32 %v1175, 0.088388346
        %v1404 = vmul.f32 %v1181, 0.088388346
        %v1405 = vmul.f32 %v1185, 0.088388346
        %v1406 = vmul.f32 %v1191, 0.088388346
        %v1407 = vmul.f32 %v1195, 0.088388346
        %v1408 = vmul.f32 %v1201, 0.088388346
        %v1409 = vmul.f32 %v1205, 0.088388346
        %v1410 = vmul.f32 %v1211, 0.088388346
        %v1411 = vmul.f32 %v1215, 0.088388346
        %v1412 = vpack.c.bf16 %v1381, %v1380
        %v1413 = vpack.c.bf16 %v1383, %v1382
        %v1414 = vpack.c.bf16 %v1385, %v1384
        %v1415 = vpack.c.bf16 %v1387, %v1386
        %v1416 = vpack.c.bf16 %v1389, %v1388
        %v1417 = vpack.c.bf16 %v1391, %v1390
        %v1418 = vpack.c.bf16 %v1393, %v1392
        %v1419 = vpack.c.bf16 %v1395, %v1394
        %v1420 = vpack.c.bf16 %v1397, %v1396
        %v1421 = vpack.c.bf16 %v1399, %v1398
        %v1422 = vpack.c.bf16 %v1401, %v1400
        %v1423 = vpack.c.bf16 %v1403, %v1402
        %v1424 = vpack.c.bf16 %v1405, %v1404
        %v1425 = vpack.c.bf16 %v1407, %v1406
        %v1426 = vpack.c.bf16 %v1409, %v1408
        %v1427 = vpack.c.bf16 %v1411, %v1410
        %v1444 = vunpack.c.l.b16 %v1412
        %v1445 = vunpack.c.h.b16 %v1412
        %v1446 = vunpack.c.l.b16 %v1413
        %v1447 = vunpack.c.h.b16 %v1413
        %v1448 = vunpack.c.l.b16 %v1414
        %v1449 = vunpack.c.h.b16 %v1414
        %v1450 = vunpack.c.l.b16 %v1415
        %v1451 = vunpack.c.h.b16 %v1415
        %v1452 = vunpack.c.l.b16 %v1416
        %v1453 = vunpack.c.h.b16 %v1416
        %v1454 = vunpack.c.l.b16 %v1417
        %v1455 = vunpack.c.h.b16 %v1417
        %v1456 = vunpack.c.l.b16 %v1418
        %v1457 = vunpack.c.h.b16 %v1418
        %v1458 = vunpack.c.l.b16 %v1419
        %v1459 = vunpack.c.h.b16 %v1419
        %v1460 = vunpack.c.l.b16 %v1420
        %v1461 = vunpack.c.h.b16 %v1420
        %v1462 = vunpack.c.l.b16 %v1421
        %v1463 = vunpack.c.h.b16 %v1421
        %v1464 = vunpack.c.l.b16 %v1422
        %v1465 = vunpack.c.h.b16 %v1422
        %v1466 = vunpack.c.l.b16 %v1423
        %v1467 = vunpack.c.h.b16 %v1423
        %v1468 = vunpack.c.l.b16 %v1424
        %v1469 = vunpack.c.h.b16 %v1424
        %v1470 = vunpack.c.l.b16 %v1425
        %v1471 = vunpack.c.h.b16 %v1425
        %v1472 = vunpack.c.l.b16 %v1426
        %v1473 = vunpack.c.h.b16 %v1426
        %v1474 = vunpack.c.l.b16 %v1427
        %v1475 = vunpack.c.h.b16 %v1427
        %v1476 = vpack.c.b16 %v1444, %v1444
        %v1477 = vpack.c.b16 %v1445, %v1445
        %v1478 = vpack.c.b16 %v1446, %v1446
        %v1479 = vpack.c.b16 %v1447, %v1447
        %v1480 = vpack.c.b16 %v1448, %v1448
        %v1481 = vpack.c.b16 %v1449, %v1449
        %v1482 = vpack.c.b16 %v1450, %v1450
        %v1483 = vpack.c.b16 %v1451, %v1451
        %v1484 = vpack.c.b16 %v1452, %v1452
        %v1485 = vpack.c.b16 %v1453, %v1453
        %v1486 = vpack.c.b16 %v1454, %v1454
        %v1487 = vpack.c.b16 %v1455, %v1455
        %v1488 = vpack.c.b16 %v1456, %v1456
        %v1489 = vpack.c.b16 %v1457, %v1457
        %v1490 = vpack.c.b16 %v1458, %v1458
        %v1491 = vpack.c.b16 %v1459, %v1459
        %v1492 = vpack.c.b16 %v1460, %v1460
        %v1493 = vpack.c.b16 %v1461, %v1461
        %v1494 = vpack.c.b16 %v1462, %v1462
        %v1495 = vpack.c.b16 %v1463, %v1463
        %v1496 = vpack.c.b16 %v1464, %v1464
        %v1497 = vpack.c.b16 %v1465, %v1465
        %v1498 = vpack.c.b16 %v1466, %v1466
        %v1499 = vpack.c.b16 %v1467, %v1467
        %v1500 = vpack.c.b16 %v1468, %v1468
        %v1501 = vpack.c.b16 %v1469, %v1469
        %v1502 = vpack.c.b16 %v1470, %v1470
        %v1503 = vpack.c.b16 %v1471, %v1471
        %v1504 = vpack.c.b16 %v1472, %v1472
        %v1505 = vpack.c.b16 %v1473, %v1473
        %v1506 = vpack.c.b16 %v1474, %v1474
        %v1507 = vpack.c.b16 %v1475, %v1475
        %1540 = vst [vmem:[%s335] sm:$0xf] %v1476
        %1541 = vst [vmem:[%s335 + $0x4] sm:$0xf] %v1477
        %1542 = vst [vmem:[%s335 + $0x8] sm:$0xf] %v1478
        %1543 = vst [vmem:[%s335 + $0xc] sm:$0xf] %v1479
        %1544 = vst [vmem:[%s335 + $0x10] sm:$0xf] %v1480
        %1545 = vst [vmem:[%s335 + $0x14] sm:$0xf] %v1481
        %1546 = vst [vmem:[%s335 + $0x18] sm:$0xf] %v1482
        %1547 = vst [vmem:[%s335 + $0x1c] sm:$0xf] %v1483
        %1548 = vst [vmem:[%s335 + $0x20] sm:$0xf] %v1484
        %1549 = vst [vmem:[%s335 + $0x24] sm:$0xf] %v1485
        %1550 = vst [vmem:[%s335 + $0x28] sm:$0xf] %v1486
        %1551 = vst [vmem:[%s335 + $0x2c] sm:$0xf] %v1487
        %1552 = vst [vmem:[%s335 + $0x30] sm:$0xf] %v1488
        %1553 = vst [vmem:[%s335 + $0x34] sm:$0xf] %v1489
        %1554 = vst [vmem:[%s335 + $0x38] sm:$0xf] %v1490
        %1555 = vst [vmem:[%s335 + $0x3c] sm:$0xf] %v1491
        %1556 = vst [vmem:[%s335 + $0x40] sm:$0xf] %v1492
        %1557 = vst [vmem:[%s335 + $0x44] sm:$0xf] %v1493
        %1558 = vst [vmem:[%s335 + $0x48] sm:$0xf] %v1494
        %1559 = vst [vmem:[%s335 + $0x4c] sm:$0xf] %v1495
        %1560 = vst [vmem:[%s335 + $0x50] sm:$0xf] %v1496
        %1561 = vst [vmem:[%s335 + $0x54] sm:$0xf] %v1497
        %1562 = vst [vmem:[%s335 + $0x58] sm:$0xf] %v1498
        %1563 = vst [vmem:[%s335 + $0x5c] sm:$0xf] %v1499
        %1564 = vst [vmem:[%s335 + $0x60] sm:$0xf] %v1500
        %1565 = vst [vmem:[%s335 + $0x64] sm:$0xf] %v1501
        %1566 = vst [vmem:[%s335 + $0x68] sm:$0xf] %v1502
        %1567 = vst [vmem:[%s335 + $0x6c] sm:$0xf] %v1503
        %1568 = vst [vmem:[%s335 + $0x70] sm:$0xf] %v1504
        %1569 = vst [vmem:[%s335 + $0x74] sm:$0xf] %v1505
        %1570 = vst [vmem:[%s335 + $0x78] sm:$0xf] %v1506
        %1571 = vst [vmem:[%s335 + $0x7c] sm:$0xf] %v1507
        %v1572 = vpack.c.bf16 %v1067, %v1063
        %v1573 = vpack.c.bf16 %v1077, %v1073
        %v1574 = vpack.c.bf16 %v1087, %v1083
        %v1575 = vpack.c.bf16 %v1097, %v1093
        %v1576 = vpack.c.bf16 %v1107, %v1103
        %v1577 = vpack.c.bf16 %v1117, %v1113
        %v1578 = vpack.c.bf16 %v1127, %v1123
        %v1579 = vpack.c.bf16 %v1137, %v1133
        %v1580 = vpack.c.bf16 %v1147, %v1143
        %v1581 = vpack.c.bf16 %v1157, %v1153
        %v1582 = vpack.c.bf16 %v1167, %v1163
        %v1583 = vpack.c.bf16 %v1177, %v1173
        %v1584 = vpack.c.bf16 %v1187, %v1183
        %v1585 = vpack.c.bf16 %v1197, %v1193
        %v1586 = vpack.c.bf16 %v1207, %v1203
        %v1587 = vpack.c.bf16 %v1217, %v1213
        %v1604 = vunpack.c.l.b16 %v1572
        %v1605 = vunpack.c.h.b16 %v1572
        %v1606 = vunpack.c.l.b16 %v1573
        %v1607 = vunpack.c.h.b16 %v1573
        %v1608 = vunpack.c.l.b16 %v1574
        %v1609 = vunpack.c.h.b16 %v1574
        %v1610 = vunpack.c.l.b16 %v1575
        %v1611 = vunpack.c.h.b16 %v1575
        %v1612 = vunpack.c.l.b16 %v1576
        %v1613 = vunpack.c.h.b16 %v1576
        %v1614 = vunpack.c.l.b16 %v1577
        %v1615 = vunpack.c.h.b16 %v1577
        %v1616 = vunpack.c.l.b16 %v1578
        %v1617 = vunpack.c.h.b16 %v1578
        %v1618 = vunpack.c.l.b16 %v1579
        %v1619 = vunpack.c.h.b16 %v1579
        %v1620 = vunpack.c.l.b16 %v1580
        %v1621 = vunpack.c.h.b16 %v1580
        %v1622 = vunpack.c.l.b16 %v1581
        %v1623 = vunpack.c.h.b16 %v1581
        %v1624 = vunpack.c.l.b16 %v1582
        %v1625 = vunpack.c.h.b16 %v1582
        %v1626 = vunpack.c.l.b16 %v1583
        %v1627 = vunpack.c.h.b16 %v1583
        %v1628 = vunpack.c.l.b16 %v1584
        %v1629 = vunpack.c.h.b16 %v1584
        %v1630 = vunpack.c.l.b16 %v1585
        %v1631 = vunpack.c.h.b16 %v1585
        %v1632 = vunpack.c.l.b16 %v1586
        %v1633 = vunpack.c.h.b16 %v1586
        %v1634 = vunpack.c.l.b16 %v1587
        %v1635 = vunpack.c.h.b16 %v1587
        %v1636 = vpack.c.b16 %v1604, %v1604
        %v1637 = vpack.c.b16 %v1605, %v1605
        %v1638 = vpack.c.b16 %v1606, %v1606
        %v1639 = vpack.c.b16 %v1607, %v1607
        %v1640 = vpack.c.b16 %v1608, %v1608
        %v1641 = vpack.c.b16 %v1609, %v1609
        %v1642 = vpack.c.b16 %v1610, %v1610
        %v1643 = vpack.c.b16 %v1611, %v1611
        %v1644 = vpack.c.b16 %v1612, %v1612
        %v1645 = vpack.c.b16 %v1613, %v1613
        %v1646 = vpack.c.b16 %v1614, %v1614
        %v1647 = vpack.c.b16 %v1615, %v1615
        %v1648 = vpack.c.b16 %v1616, %v1616
        %v1649 = vpack.c.b16 %v1617, %v1617
        %v1650 = vpack.c.b16 %v1618, %v1618
        %v1651 = vpack.c.b16 %v1619, %v1619
        %v1652 = vpack.c.b16 %v1620, %v1620
        %v1653 = vpack.c.b16 %v1621, %v1621
        %v1654 = vpack.c.b16 %v1622, %v1622
        %v1655 = vpack.c.b16 %v1623, %v1623
        %v1656 = vpack.c.b16 %v1624, %v1624
        %v1657 = vpack.c.b16 %v1625, %v1625
        %v1658 = vpack.c.b16 %v1626, %v1626
        %v1659 = vpack.c.b16 %v1627, %v1627
        %v1660 = vpack.c.b16 %v1628, %v1628
        %v1661 = vpack.c.b16 %v1629, %v1629
        %v1662 = vpack.c.b16 %v1630, %v1630
        %v1663 = vpack.c.b16 %v1631, %v1631
        %v1664 = vpack.c.b16 %v1632, %v1632
        %v1665 = vpack.c.b16 %v1633, %v1633
        %v1666 = vpack.c.b16 %v1634, %v1634
        %v1667 = vpack.c.b16 %v1635, %v1635
        %1700 = vst [vmem:[%s342] sm:$0xf] %v1636
        %1701 = vst [vmem:[%s342 + $0x4] sm:$0xf] %v1637
        %1702 = vst [vmem:[%s342 + $0x8] sm:$0xf] %v1638
        %1703 = vst [vmem:[%s342 + $0xc] sm:$0xf] %v1639
        %1704 = vst [vmem:[%s342 + $0x10] sm:$0xf] %v1640
        %1705 = vst [vmem:[%s342 + $0x14] sm:$0xf] %v1641
        %1706 = vst [vmem:[%s342 + $0x18] sm:$0xf] %v1642
        %1707 = vst [vmem:[%s342 + $0x1c] sm:$0xf] %v1643
        %1708 = vst [vmem:[%s342 + $0x20] sm:$0xf] %v1644
        %1709 = vst [vmem:[%s342 + $0x24] sm:$0xf] %v1645
        %1710 = vst [vmem:[%s342 + $0x28] sm:$0xf] %v1646
        %1711 = vst [vmem:[%s342 + $0x2c] sm:$0xf] %v1647
        %1712 = vst [vmem:[%s342 + $0x30] sm:$0xf] %v1648
        %1713 = vst [vmem:[%s342 + $0x34] sm:$0xf] %v1649
        %1714 = vst [vmem:[%s342 + $0x38] sm:$0xf] %v1650
        %1715 = vst [vmem:[%s342 + $0x3c] sm:$0xf] %v1651
        %1716 = vst [vmem:[%s342 + $0x40] sm:$0xf] %v1652
        %1717 = vst [vmem:[%s342 + $0x44] sm:$0xf] %v1653
        %1718 = vst [vmem:[%s342 + $0x48] sm:$0xf] %v1654
        %1719 = vst [vmem:[%s342 + $0x4c] sm:$0xf] %v1655
        %1720 = vst [vmem:[%s342 + $0x50] sm:$0xf] %v1656
        %1721 = vst [vmem:[%s342 + $0x54] sm:$0xf] %v1657
        %1722 = vst [vmem:[%s342 + $0x58] sm:$0xf] %v1658
        %1723 = vst [vmem:[%s342 + $0x5c] sm:$0xf] %v1659
        %1724 = vst [vmem:[%s342 + $0x60] sm:$0xf] %v1660
        %1725 = vst [vmem:[%s342 + $0x64] sm:$0xf] %v1661
        %1726 = vst [vmem:[%s342 + $0x68] sm:$0xf] %v1662
        %1727 = vst [vmem:[%s342 + $0x6c] sm:$0xf] %v1663
        %1728 = vst [vmem:[%s342 + $0x70] sm:$0xf] %v1664
        %1729 = vst [vmem:[%s342 + $0x74] sm:$0xf] %v1665
        %1730 = vst [vmem:[%s342 + $0x78] sm:$0xf] %v1666
        %1731 = vst [vmem:[%s342 + $0x7c] sm:$0xf] %v1667
        %v1732 = vpack.c.bf16 %v1257, %v1254
        %v1733 = vpack.c.bf16 %v1265, %v1262
        %v1734 = vpack.c.bf16 %v1273, %v1270
        %v1735 = vpack.c.bf16 %v1281, %v1278
        %v1736 = vpack.c.bf16 %v1289, %v1286
        %v1737 = vpack.c.bf16 %v1297, %v1294
        %v1738 = vpack.c.bf16 %v1305, %v1302
        %v1739 = vpack.c.bf16 %v1313, %v1310
        %v1740 = vpack.c.bf16 %v1321, %v1318
        %v1741 = vpack.c.bf16 %v1329, %v1326
        %v1742 = vpack.c.bf16 %v1337, %v1334
        %v1743 = vpack.c.bf16 %v1345, %v1342
        %v1744 = vpack.c.bf16 %v1353, %v1350
        %v1745 = vpack.c.bf16 %v1361, %v1358
        %v1746 = vpack.c.bf16 %v1369, %v1366
        %v1747 = vpack.c.bf16 %v1377, %v1374
        %v1764 = vunpack.c.l.b16 %v1732
        %v1765 = vunpack.c.h.b16 %v1732
        %v1766 = vunpack.c.l.b16 %v1733
        %v1767 = vunpack.c.h.b16 %v1733
        %v1768 = vunpack.c.l.b16 %v1734
        %v1769 = vunpack.c.h.b16 %v1734
        %v1770 = vunpack.c.l.b16 %v1735
        %v1771 = vunpack.c.h.b16 %v1735
        %v1772 = vunpack.c.l.b16 %v1736
        %v1773 = vunpack.c.h.b16 %v1736
        %v1774 = vunpack.c.l.b16 %v1737
        %v1775 = vunpack.c.h.b16 %v1737
        %v1776 = vunpack.c.l.b16 %v1738
        %v1777 = vunpack.c.h.b16 %v1738
        %v1778 = vunpack.c.l.b16 %v1739
        %v1779 = vunpack.c.h.b16 %v1739
        %v1780 = vunpack.c.l.b16 %v1740
        %v1781 = vunpack.c.h.b16 %v1740
        %v1782 = vunpack.c.l.b16 %v1741
        %v1783 = vunpack.c.h.b16 %v1741
        %v1784 = vunpack.c.l.b16 %v1742
        %v1785 = vunpack.c.h.b16 %v1742
        %v1786 = vunpack.c.l.b16 %v1743
        %v1787 = vunpack.c.h.b16 %v1743
        %v1788 = vunpack.c.l.b16 %v1744
        %v1789 = vunpack.c.h.b16 %v1744
        %v1790 = vunpack.c.l.b16 %v1745
        %v1791 = vunpack.c.h.b16 %v1745
        %v1792 = vunpack.c.l.b16 %v1746
        %v1793 = vunpack.c.h.b16 %v1746
        %v1794 = vunpack.c.l.b16 %v1747
        %v1795 = vunpack.c.h.b16 %v1747
        %v1796 = vpack.c.b16 %v1764, %v1764
        %v1797 = vpack.c.b16 %v1765, %v1765
        %v1798 = vpack.c.b16 %v1766, %v1766
        %v1799 = vpack.c.b16 %v1767, %v1767
        %v1800 = vpack.c.b16 %v1768, %v1768
        %v1801 = vpack.c.b16 %v1769, %v1769
        %v1802 = vpack.c.b16 %v1770, %v1770
        %v1803 = vpack.c.b16 %v1771, %v1771
        %v1804 = vpack.c.b16 %v1772, %v1772
        %v1805 = vpack.c.b16 %v1773, %v1773
        %v1806 = vpack.c.b16 %v1774, %v1774
        %v1807 = vpack.c.b16 %v1775, %v1775
        %v1808 = vpack.c.b16 %v1776, %v1776
        %v1809 = vpack.c.b16 %v1777, %v1777
        %v1810 = vpack.c.b16 %v1778, %v1778
        %v1811 = vpack.c.b16 %v1779, %v1779
        %v1812 = vpack.c.b16 %v1780, %v1780
        %v1813 = vpack.c.b16 %v1781, %v1781
        %v1814 = vpack.c.b16 %v1782, %v1782
        %v1815 = vpack.c.b16 %v1783, %v1783
        %v1816 = vpack.c.b16 %v1784, %v1784
        %v1817 = vpack.c.b16 %v1785, %v1785
        %v1818 = vpack.c.b16 %v1786, %v1786
        %v1819 = vpack.c.b16 %v1787, %v1787
        %v1820 = vpack.c.b16 %v1788, %v1788
        %v1821 = vpack.c.b16 %v1789, %v1789
        %v1822 = vpack.c.b16 %v1790, %v1790
        %v1823 = vpack.c.b16 %v1791, %v1791
        %v1824 = vpack.c.b16 %v1792, %v1792
        %v1825 = vpack.c.b16 %v1793, %v1793
        %v1826 = vpack.c.b16 %v1794, %v1794
        %v1827 = vpack.c.b16 %v1795, %v1795
        %1860 = vst [vmem:[%s349] sm:$0xf] %v1796
        %1861 = vst [vmem:[%s349 + $0x4] sm:$0xf] %v1797
        %1862 = vst [vmem:[%s349 + $0x8] sm:$0xf] %v1798
        %1863 = vst [vmem:[%s349 + $0xc] sm:$0xf] %v1799
        %1864 = vst [vmem:[%s349 + $0x10] sm:$0xf] %v1800
        %1865 = vst [vmem:[%s349 + $0x14] sm:$0xf] %v1801
        %1866 = vst [vmem:[%s349 + $0x18] sm:$0xf] %v1802
        %1867 = vst [vmem:[%s349 + $0x1c] sm:$0xf] %v1803
        %1868 = vst [vmem:[%s349 + $0x20] sm:$0xf] %v1804
        %1869 = vst [vmem:[%s349 + $0x24] sm:$0xf] %v1805
        %1870 = vst [vmem:[%s349 + $0x28] sm:$0xf] %v1806
        %1871 = vst [vmem:[%s349 + $0x2c] sm:$0xf] %v1807
        %1872 = vst [vmem:[%s349 + $0x30] sm:$0xf] %v1808
        %1873 = vst [vmem:[%s349 + $0x34] sm:$0xf] %v1809
        %1874 = vst [vmem:[%s349 + $0x38] sm:$0xf] %v1810
        %1875 = vst [vmem:[%s349 + $0x3c] sm:$0xf] %v1811
        %1876 = vst [vmem:[%s349 + $0x40] sm:$0xf] %v1812
        %1877 = vst [vmem:[%s349 + $0x44] sm:$0xf] %v1813
        %1878 = vst [vmem:[%s349 + $0x48] sm:$0xf] %v1814
        %1879 = vst [vmem:[%s349 + $0x4c] sm:$0xf] %v1815
        %1880 = vst [vmem:[%s349 + $0x50] sm:$0xf] %v1816
        %1881 = vst [vmem:[%s349 + $0x54] sm:$0xf] %v1817
        %1882 = vst [vmem:[%s349 + $0x58] sm:$0xf] %v1818
        %1883 = vst [vmem:[%s349 + $0x5c] sm:$0xf] %v1819
        %1884 = vst [vmem:[%s349 + $0x60] sm:$0xf] %v1820
        %1885 = vst [vmem:[%s349 + $0x64] sm:$0xf] %v1821
        %1886 = vst [vmem:[%s349 + $0x68] sm:$0xf] %v1822
        %1887 = vst [vmem:[%s349 + $0x6c] sm:$0xf] %v1823
        %1888 = vst [vmem:[%s349 + $0x70] sm:$0xf] %v1824
        %1889 = vst [vmem:[%s349 + $0x74] sm:$0xf] %v1825
        %1890 = vst [vmem:[%s349 + $0x78] sm:$0xf] %v1826
        %1891 = vst [vmem:[%s349 + $0x7c] sm:$0xf] %v1827
        %s1892 = sand.u32 %s142, 1
        %s1893 = scalar_lea.sflag [#allocation4], %s1892
        %s1894 = sand.u32 %s142, 1
        %s1895 = smul.addr %s1894, 128
        %s1896 = scalar_lea.vmem [#allocation10], %s1895
        %s1897 = sand.u32 %s29, 1
        %s1898 = scalar_lea.sflag [#allocation12], %s1897
        %s1899 = sand.u32 %s170, 1
        %s1900 = smul.addr %s1899, 128
        %s1901 = scalar_lea.vmem [#allocation11], %s1900
        %s1902 = sand.u32 %s29, 1
        %s1903 = scalar_lea.sflag [#allocation12], %s1902
        %s1904 = sand.u32 %s198, 1
        %s1905 = smul.addr %s1904, 128
        %s1906 = scalar_lea.vmem [#allocation13], %s1905
        // Predicated region
        $region53: #{tpu_custom_call.1} parent=35 // pred_check
          %p1907 = pneg %p152
        $region54: #{tpu_custom_call.1} parent=35 // pred_check_branch
          %1909 = sbr.rel (%p1907) target = $region56
        $region55: #{tpu_custom_call.1} parent=35 // pred_region
          %s1910 = smul.u32 32, %s34
          %s1912 = ssub.s32 2048, 2048
          %1913 = vsyncadd %s1893, %s1912
          %s1914 = smul.addr %s33, 32
          %s1915 = sadd.s32 %s1910, %s1914
          %s1916 = smul.addr %s1915, 64
          %s1917 = scalar_lea.hbm %s4, %s1916
          %s1918 = sshll.u32 %s1896, 4
          %s1919 = int_to_ptr.vmem [resolvable:$true] %s1918
          %1924 = dma.vmem_to_hbm [thread:$0]  %s1919, 2048, %s1917, %s1893, 64, 64, 4
        $region56: #{tpu_custom_call.1} parent=35 // pred_fallthru
          _
        // Predicated region
        $region57: #{tpu_custom_call.1} parent=35 // pred_check
          %p1925 = pneg %p180
        $region58: #{tpu_custom_call.1} parent=35 // pred_check_branch
          %1927 = sbr.rel (%p1925) target = $region60
        $region59: #{tpu_custom_call.1} parent=35 // pred_region
          %s1928 = smul.u32 32, %s34
          %s1930 = ssub.s32 2048, 2048
          %1931 = vsyncadd %s1898, %s1930
          %s1932 = smul.addr %s33, 32
          %s1933 = sadd.s32 %s1928, %s1932
          %s1934 = smul.addr %s1933, 64
          %s1935 = scalar_lea.hbm %s5, %s1934
          %s1936 = sshll.u32 %s1901, 4
          %s1937 = int_to_ptr.vmem [resolvable:$true] %s1936
          %1942 = dma.vmem_to_hbm [thread:$0]  %s1937, 2048, %s1935, %s1898, 64, 64, 4
        $region60: #{tpu_custom_call.1} parent=35 // pred_fallthru
          _
        // Predicated region
        $region61: #{tpu_custom_call.1} parent=35 // pred_check
          %p1943 = pneg %p208
        $region62: #{tpu_custom_call.1} parent=35 // pred_check_branch
          %1945 = sbr.rel (%p1943) target = $region64
        $region63: #{tpu_custom_call.1} parent=35 // pred_region
          %s1946 = smul.u32 32, %s34
          %s1948 = ssub.s32 2048, 2048
          %1949 = vsyncadd %s1903, %s1948
          %s1950 = smul.addr %s33, 32
          %s1951 = sadd.s32 %s1946, %s1950
          %s1952 = smul.addr %s1951, 64
          %s1953 = scalar_lea.hbm %s6, %s1952
          %s1954 = sshll.u32 %s1906, 4
          %s1955 = int_to_ptr.vmem [resolvable:$true] %s1954
          %1960 = dma.vmem_to_hbm [thread:$0]  %s1955, 2048, %s1953, %s1903, 64, 64, 4
        $region64: #{tpu_custom_call.1} parent=35 // pred_fallthru
          _
      $region36: #{tpu_custom_call.1} parent=5 // pred_fallthru
        _
      %p1961 = scmp.le.s32.totalorder 2, %s24
      // Predicated region
      $region65: #{tpu_custom_call.1} parent=5 // pred_check
        %p1962 = pneg %p1961
      $region66: #{tpu_custom_call.1} parent=5 // pred_check_branch
        %1964 = sbr.rel (%p1962) target = $region68
      $region67: #{tpu_custom_call.1} parent=5 // pred_region
        %s1965 = ssub.s32 %s24, 2
        // Predicated region
        $region69: #{tpu_custom_call.1} parent=67 // pred_check
          %p1966 = pneg %p158
        $region70: #{tpu_custom_call.1} parent=67 // pred_check_branch
          %1968 = sbr.rel (%p1966) target = $region72
        $region71: #{tpu_custom_call.1} parent=67 // pred_region
          %s1969 = sand.u32 %s143, 1
          %s1970 = scalar_lea.sflag [#allocation4], %s1969
          %s1971 = sand.u32 %s143, 1
          %s1972 = smul.addr %s1971, 128
          %s1973 = scalar_lea.vmem [#allocation10], %s1972
          %1974 = dma.done %s1970, 2048
        $region72: #{tpu_custom_call.1} parent=67 // pred_fallthru
          _
        // Predicated region
        $region73: #{tpu_custom_call.1} parent=67 // pred_check
          %p1975 = pneg %p186
        $region74: #{tpu_custom_call.1} parent=67 // pred_check_branch
          %1977 = sbr.rel (%p1975) target = $region76
        $region75: #{tpu_custom_call.1} parent=67 // pred_region
          %s1978 = sand.u32 %s30, 1
          %s1979 = scalar_lea.sflag [#allocation12], %s1978
          %s1980 = sand.u32 %s171, 1
          %s1981 = smul.addr %s1980, 128
          %s1982 = scalar_lea.vmem [#allocation11], %s1981
          %1983 = dma.done %s1979, 2048
        $region76: #{tpu_custom_call.1} parent=67 // pred_fallthru
          _
        // Predicated region
        $region77: #{tpu_custom_call.1} parent=67 // pred_check
          %p1984 = pneg %p214
        $region78: #{tpu_custom_call.1} parent=67 // pred_check_branch
          %1986 = sbr.rel (%p1984) target = $region80
        $region79: #{tpu_custom_call.1} parent=67 // pred_region
          %s1987 = sand.u32 %s30, 1
          %s1988 = scalar_lea.sflag [#allocation12], %s1987
          %s1989 = sand.u32 %s199, 1
          %s1990 = smul.addr %s1989, 128
          %s1991 = scalar_lea.vmem [#allocation13], %s1990
          %1992 = dma.done %s1988, 2048
        $region80: #{tpu_custom_call.1} parent=67 // pred_fallthru
          _
      $region68: #{tpu_custom_call.1} parent=5 // pred_fallthru
        _
    $region6: #{tpu_custom_call.1} parent=1 // loop_footer
      %s28 = sadd.s32 1, %s24
    $region7: #{tpu_custom_call.1} parent=1 // loop_footer_branch
      %23 = sbr.rel target = $region3
    $region8: #{tpu_custom_call.1} parent=1 // loop_exit
      _
    %1993 = vsyncpa [#allocation3], 1
    %s1994 = scalar_lea.sflag [#allocation3], 1
    %1995 = vsyncpa %s1994, 1
    %1996 = vsyncpa [#allocation6], 1
    %1997 = vsyncpa [#allocation9], 1
    %1998 = vsyncpa [#allocation4], 1
    %s1999 = scalar_lea.sflag [#allocation4], 1
    %2000 = vsyncpa %s1999, 1
    %2001 = vsyncpa [#allocation12], 1
    %s2002 = scalar_lea.sflag [#allocation12], 1
    %2003 = vsyncpa %s2002, 1

</llo_original>
